<compile_context>
chip_gen: v7x
topology: tpu7x:2x2x1
jax: 0.10.0
libtpu: 0.0.40
codegen_flags: <defaults>
</compile_context>

<pallas_src>
import jax
import jax.numpy as jnp
from jax.experimental import pallas as pl
from jax.experimental.pallas import tpu as pltpu

LANE = 128      # TPU lane width (last-dim tiling)
SUBLANE = 8     # TPU sublane width (second-to-last-dim tiling)


def _round_up(x, m):
    return ((x + m - 1) // m) * m


def _tensorcores_per_chip():
    """2 TensorCores on v7x, 1 on v5e/v6e. Conservative default of 1."""
    try:
        kind = jax.devices()[0].device_kind.lower()
    except Exception:
        return 1
    return 2 if ("v7" in kind or "7x" in kind) else 1


def _mlp_softmax_kernel(x_ref, w1_ref, b1_ref, w2_ref, b2_ref, w3_ref, b3_ref,
                        o_ref):
    """Fused 3-layer MLP + softmax on one [tb, d_in] batch tile.

    Weights live in VMEM across grid steps (constant index_maps). Padded
    logit lanes are already pinned to -1e30 via the bias (wrapper prep), so
    they vanish in the softmax. Only the real n_out lanes are stored.
    """
    x = x_ref[...]

    # Layer 1: Linear + ReLU  (K=16: Mosaic handles sub-128 contraction dims)
    h = jnp.dot(x, w1_ref[...], preferred_element_type=jnp.float32) + b1_ref[...]
    h = jnp.maximum(h, 0.0)

    # Layer 2: Linear + ReLU
    h = jnp.dot(h, w2_ref[...], preferred_element_type=jnp.float32) + b2_ref[...]
    h = jnp.maximum(h, 0.0)

    # Layer 3: Linear (no activation); padded lanes get -1e30 from the bias.
    logits = jnp.dot(h, w3_ref[...], preferred_element_type=jnp.float32) + b3_ref[...]

    # Numerically stable softmax with exact division (negligible cost here).
    m = jnp.max(logits, axis=-1, keepdims=True)
    e = jnp.exp(logits - m)
    denom = jnp.sum(e, axis=-1, keepdims=True)
    probs = e / denom

    n_out = o_ref.shape[-1]
    o_ref[...] = probs[:, :n_out].astype(o_ref.dtype)


def prepare_params(params):
    """One-time parameter prep (do this once; reuse across forward calls).

    params = [(W1, b1), (W2, b2), (W3, b3)] with W_i: [in, out], b_i: [1, out].
    Pads hidden/output feature dims to 128 lanes; padded b3 entries are -1e30
    so padded logits never contribute to the softmax.
    """
    (w1, b1), (w2, b2), (w3, b3) = params
    d_in = w1.shape[0]
    n_out = w3.shape[1]
    h1_p = _round_up(w1.shape[1], LANE)
    h2_p = _round_up(w2.shape[1], LANE)
    n_out_p = _round_up(n_out, LANE)

    def pad2(a, rows, cols, cval=0.0):
        a = jnp.asarray(a, jnp.float32)
        return jnp.pad(a, ((0, rows - a.shape[0]), (0, cols - a.shape[1])),
                       constant_values=cval)

    w1p = pad2(w1, d_in, h1_p)
    w2p = pad2(w2, h1_p, h2_p)
    w3p = pad2(w3, h2_p, n_out_p)
    b1p = pad2(b1, 1, h1_p)
    b2p = pad2(b2, 1, h2_p)
    b3p = pad2(b3, 1, n_out_p, cval=-1e30)   # masks padded softmax lanes

    return {"weights": (w1p, b1p, w2p, b2p, w3p, b3p),
            "d_in": d_in, "n_out": n_out}


def mlp_forward(x, prepped):
    """x: [batch, d_in] float32. Returns softmax(MLP(x)): [batch, n_out] f32."""
    w1p, b1p, w2p, b2p, w3p, b3p = prepped["weights"]
    d_in = prepped["d_in"]
    n_out = prepped["n_out"]
    batch = x.shape[0]
    assert x.shape[1] == d_in

    # Grid policy: single step on single-TC chips (v5e/v6e); on v7x use a
    # 2-step CORE_PARALLEL grid so each TensorCore processes one batch tile.
    n_cores = _tensorcores_per_chip()
    n_steps = n_cores if (n_cores > 1 and batch >= n_cores * SUBLANE) else 1
    tb = _round_up(pl.cdiv(batch, n_steps), SUBLANE)
    b_p = tb * n_steps
    if b_p != batch:
        x = jnp.pad(x, ((0, b_p - batch), (0, 0)))   # rows only, no lane pad

    dim_sem = (pltpu.CORE_PARALLEL,) if n_steps > 1 else ("arbitrary",)

    h1_p, h2_p, n_out_p = w1p.shape[1], w2p.shape[1], w3p.shape[1]

    cost = pl.CostEstimate(
        flops=2 * b_p * (d_in * h1_p + h1_p * h2_p + h2_p * n_out_p),
        transcendentals=b_p * n_out_p,
        bytes_accessed=(x.size * 4
                        + (w1p.size + w2p.size + w3p.size) * 4
                        + (b1p.size + b2p.size + b3p.size) * 4
                        + b_p * n_out * 4),
    )

    out = pl.pallas_call(
        _mlp_softmax_kernel,
        out_shape=jax.ShapeDtypeStruct((b_p, n_out), jnp.float32),
        grid=(n_steps,),
        in_specs=[
            pl.BlockSpec((tb, d_in), lambda i: (i, 0)),        # x tile, unpadded lanes
            pl.BlockSpec((d_in, h1_p), lambda i: (0, 0)),      # W1 (VMEM-resident)
            pl.BlockSpec((1, h1_p), lambda i: (0, 0)),         # b1
            pl.BlockSpec((h1_p, h2_p), lambda i: (0, 0)),      # W2
            pl.BlockSpec((1, h2_p), lambda i: (0, 0)),         # b2
            pl.BlockSpec((h2_p, n_out_p), lambda i: (0, 0)),   # W3
            pl.BlockSpec((1, n_out_p), lambda i: (0, 0)),      # b3 (pads = -1e30)
        ],
        out_specs=pl.BlockSpec((tb, n_out), lambda i: (i, 0)), # narrow writeback
        compiler_params=pltpu.CompilerParams(dimension_semantics=dim_sem),
        cost_estimate=cost,
    )(x, w1p, b1p, w2p, b2p, w3p, b3p)

    return out if b_p == batch else out[:batch]


def init_params(key, sizes):
    """Deterministic init mirroring torch.nn.Linear default:
    U(-1/sqrt(fan_in), 1/sqrt(fan_in)) for both weights and biases."""
    params = []
    for i in range(len(sizes) - 1):
        fan_in, fan_out = sizes[i], sizes[i + 1]
        key, kw, kb = jax.random.split(key, 3)
        bound = 1.0 / (fan_in ** 0.5)
        w = jax.random.uniform(kw, (fan_in, fan_out), jnp.float32,
                               minval=-bound, maxval=bound)
        b = jax.random.uniform(kb, (1, fan_out), jnp.float32,
                               minval=-bound, maxval=bound)
        params.append((w, b))
    return params


def mlp_reference(x, params):
    """Pure-JAX (f32) reference for correctness checking."""
    h = x
    n = len(params)
    for i, (w, b) in enumerate(params):
        h = h @ w + b
        if i < n - 1:
            h = jnp.maximum(h, 0.0)
    return jax.nn.softmax(h, axis=-1)


if __name__ == "__main__":
    sizes = [16, 32, 32, 8]   # obs_dim=16, two hidden layers of 32, 8 actions
    batch = 512               # stacked env states

    key = jax.random.PRNGKey(0)
    key, kx = jax.random.split(key)
    x = jax.random.normal(kx, (batch, sizes[0]), dtype=jnp.float32)
    params = init_params(key, sizes)

    # One-time parameter prep (hoisted out of the per-call forward path).
    prepped = prepare_params(params)

    out = jax.block_until_ready(mlp_forward(x, prepped))
    ref = mlp_reference(x, params)

    assert out.shape == (batch, sizes[-1])
    # Exact softmax divide => rows sum to 1 to f32 rounding.
    assert jnp.allclose(jnp.sum(out, axis=-1), 1.0, atol=1e-5)
    # All-f32 kernel math; tolerance covers MXU f32-pass rounding differences.
    assert jnp.allclose(out, ref, atol=5e-3, rtol=5e-3)

    print("KERNEL_OK")
</pallas_src>

<mosaic_0001>
module attributes {stable_mosaic.version = 11 : i64} {
  func.func @_mlp_softmax_kernel(%arg0: i32, %arg1: memref<512x16xf32, #tpu.memory_space<vmem>>, %arg2: memref<16x128xf32, #tpu.memory_space<vmem>>, %arg3: memref<1x128xf32, #tpu.memory_space<vmem>>, %arg4: memref<128x128xf32, #tpu.memory_space<vmem>>, %arg5: memref<1x128xf32, #tpu.memory_space<vmem>>, %arg6: memref<128x128xf32, #tpu.memory_space<vmem>>, %arg7: memref<1x128xf32, #tpu.memory_space<vmem>>, %arg8: memref<512x8xf32, #tpu.memory_space<vmem>>) attributes {dimension_semantics = [#tpu.dimension_semantics<arbitrary>], iteration_bounds = array<i64: 1>, scalar_prefetch = 0 : i64, scratch_operands = 0 : i64, tpu.core_type = #tpu.core_type<tc>, window_params = [{transform_indices = @transform_0, window_bounds = array<i64: 512, 16>}, {pipeline_mode = #tpu.pipeline_mode<synchronous>, transform_indices = @transform_1, window_bounds = array<i64: 16, 128>}, {pipeline_mode = #tpu.pipeline_mode<synchronous>, transform_indices = @transform_2, window_bounds = array<i64: 1, 128>}, {pipeline_mode = #tpu.pipeline_mode<synchronous>, transform_indices = @transform_3, window_bounds = array<i64: 128, 128>}, {pipeline_mode = #tpu.pipeline_mode<synchronous>, transform_indices = @transform_4, window_bounds = array<i64: 1, 128>}, {pipeline_mode = #tpu.pipeline_mode<synchronous>, transform_indices = @transform_5, window_bounds = array<i64: 128, 128>}, {pipeline_mode = #tpu.pipeline_mode<synchronous>, transform_indices = @transform_6, window_bounds = array<i64: 1, 128>}, {transform_indices = @transform_7, window_bounds = array<i64: 512, 8>}]} {
    %c0 = arith.constant 0 : index
    %c0_0 = arith.constant 0 : index
    %0 = vector.load %arg1[%c0, %c0_0] : memref<512x16xf32, #tpu.memory_space<vmem>>, vector<512x16xf32>
    %c0_1 = arith.constant 0 : index
    %c0_2 = arith.constant 0 : index
    %1 = vector.load %arg2[%c0_1, %c0_2] : memref<16x128xf32, #tpu.memory_space<vmem>>, vector<16x128xf32>
    %cst = arith.constant dense<0.000000e+00> : vector<512x128xf32>
    %2 = tpu.matmul %0, %1, %cst {dimension_numbers = #tpu.dot_dimension_numbers<[1], [0], [0], [1], [0, 0, 1, 1], [], []>} : vector<512x16xf32>, vector<16x128xf32>, vector<512x128xf32> -> vector<512x128xf32>
    %c0_3 = arith.constant 0 : index
    %c0_4 = arith.constant 0 : index
    %3 = vector.load %arg3[%c0_3, %c0_4] : memref<1x128xf32, #tpu.memory_space<vmem>>, vector<1x128xf32>
    %4 = vector.broadcast %3 : vector<1x128xf32> to vector<512x128xf32>
    %5 = arith.addf %2, %4 : vector<512x128xf32>
    %cst_5 = arith.constant 0.000000e+00 : f32
    %6 = vector.broadcast %cst_5 : f32 to vector<512x128xf32>
    %7 = arith.maximumf %5, %6 : vector<512x128xf32>
    %c0_6 = arith.constant 0 : index
    %c0_7 = arith.constant 0 : index
    %8 = vector.load %arg4[%c0_6, %c0_7] : memref<128x128xf32, #tpu.memory_space<vmem>>, vector<128x128xf32>
    %cst_8 = arith.constant dense<0.000000e+00> : vector<512x128xf32>
    %9 = tpu.matmul %7, %8, %cst_8 {dimension_numbers = #tpu.dot_dimension_numbers<[1], [0], [0], [1], [0, 0, 1, 1], [], []>} : vector<512x128xf32>, vector<128x128xf32>, vector<512x128xf32> -> vector<512x128xf32>
    %c0_9 = arith.constant 0 : index
    %c0_10 = arith.constant 0 : index
    %10 = vector.load %arg5[%c0_9, %c0_10] : memref<1x128xf32, #tpu.memory_space<vmem>>, vector<1x128xf32>
    %11 = vector.broadcast %10 : vector<1x128xf32> to vector<512x128xf32>
    %12 = arith.addf %9, %11 : vector<512x128xf32>
    %cst_11 = arith.constant 0.000000e+00 : f32
    %13 = vector.broadcast %cst_11 : f32 to vector<512x128xf32>
    %14 = arith.maximumf %12, %13 : vector<512x128xf32>
    %c0_12 = arith.constant 0 : index
    %c0_13 = arith.constant 0 : index
    %15 = vector.load %arg6[%c0_12, %c0_13] : memref<128x128xf32, #tpu.memory_space<vmem>>, vector<128x128xf32>
    %cst_14 = arith.constant dense<0.000000e+00> : vector<512x128xf32>
    %16 = tpu.matmul %14, %15, %cst_14 {dimension_numbers = #tpu.dot_dimension_numbers<[1], [0], [0], [1], [0, 0, 1, 1], [], []>} : vector<512x128xf32>, vector<128x128xf32>, vector<512x128xf32> -> vector<512x128xf32>
    %c0_15 = arith.constant 0 : index
    %c0_16 = arith.constant 0 : index
    %17 = vector.load %arg7[%c0_15, %c0_16] : memref<1x128xf32, #tpu.memory_space<vmem>>, vector<1x128xf32>
    %18 = vector.broadcast %17 : vector<1x128xf32> to vector<512x128xf32>
    %19 = arith.addf %16, %18 : vector<512x128xf32>
    %cst_17 = arith.constant dense<0xFF800000> : vector<512xf32>
    %20 = vector.multi_reduction <maximumf>, %19, %cst_17 [1] : vector<512x128xf32> to vector<512xf32>
    %21 = vector.shape_cast %20 : vector<512xf32> to vector<512x1xf32>
    %22 = vector.broadcast %21 : vector<512x1xf32> to vector<512x128xf32>
    %23 = arith.subf %19, %22 : vector<512x128xf32>
    %24 = math.exp %23 : vector<512x128xf32>
    %cst_18 = arith.constant dense<0.000000e+00> : vector<512xf32>
    %25 = vector.multi_reduction <add>, %24, %cst_18 [1] : vector<512x128xf32> to vector<512xf32>
    %26 = vector.shape_cast %25 : vector<512xf32> to vector<512x1xf32>
    %27 = vector.broadcast %26 : vector<512x1xf32> to vector<512x128xf32>
    %28 = arith.divf %24, %27 : vector<512x128xf32>
    %29 = vector.extract_strided_slice %28 {offsets = [0, 0], sizes = [512, 8], strides = [1, 1]} : vector<512x128xf32> to vector<512x8xf32>
    %c0_19 = arith.constant 0 : index
    %c0_20 = arith.constant 0 : index
    %30 = vector.load %arg8[%c0_19, %c0_20] : memref<512x8xf32, #tpu.memory_space<vmem>>, vector<512x8xf32>
    tpu.vector_store %arg8[%c0_19, %c0_20], %29 {strides = array<i32>} : memref<512x8xf32, #tpu.memory_space<vmem>>, vector<512x8xf32>,
    return
  }
  func.func @transform_0(%arg0: i32) -> (i32, i32) {
    %c0_i32 = arith.constant 0 : i32
    %c0_i32_0 = arith.constant 0 : i32
    return %arg0, %c0_i32 : i32, i32
  }
  func.func @transform_1(%arg0: i32) -> (i32, i32) {
    %c0_i32 = arith.constant 0 : i32
    %c0_i32_0 = arith.constant 0 : i32
    %c0_i32_1 = arith.constant 0 : i32
    return %c0_i32, %c0_i32_0 : i32, i32
  }
  func.func @transform_2(%arg0: i32) -> (i32, i32) {
    %c0_i32 = arith.constant 0 : i32
    %c0_i32_0 = arith.constant 0 : i32
    %c0_i32_1 = arith.constant 0 : i32
    return %c0_i32, %c0_i32_0 : i32, i32
  }
  func.func @transform_3(%arg0: i32) -> (i32, i32) {
    %c0_i32 = arith.constant 0 : i32
    %c0_i32_0 = arith.constant 0 : i32
    %c0_i32_1 = arith.constant 0 : i32
    return %c0_i32, %c0_i32_0 : i32, i32
  }
  func.func @transform_4(%arg0: i32) -> (i32, i32) {
    %c0_i32 = arith.constant 0 : i32
    %c0_i32_0 = arith.constant 0 : i32
    %c0_i32_1 = arith.constant 0 : i32
    return %c0_i32, %c0_i32_0 : i32, i32
  }
  func.func @transform_5(%arg0: i32) -> (i32, i32) {
    %c0_i32 = arith.constant 0 : i32
    %c0_i32_0 = arith.constant 0 : i32
    %c0_i32_1 = arith.constant 0 : i32
    return %c0_i32, %c0_i32_0 : i32, i32
  }
  func.func @transform_6(%arg0: i32) -> (i32, i32) {
    %c0_i32 = arith.constant 0 : i32
    %c0_i32_0 = arith.constant 0 : i32
    %c0_i32_1 = arith.constant 0 : i32
    return %c0_i32, %c0_i32_0 : i32, i32
  }
  func.func @transform_7(%arg0: i32) -> (i32, i32) {
    %c0_i32 = arith.constant 0 : i32
    %c0_i32_0 = arith.constant 0 : i32
    return %arg0, %c0_i32 : i32, i32
  }
}

</mosaic_0001>

<llo_original>
// kernel: tpu_custom_call.1
$region0: #{tpu_custom_call.1}
  #allocation0 [shape = 'u32[]', space=smem, size = 0x4, offset = 0x4, fixed_abs, tag = 'smem constant byte address 0x4 - core index']
  #allocation1 [shape = 'u32[144,128]{1,0:T(1,128)}', space=vmem, size = 0x12000, scoped, tag = 'internal scratch']
  %s0 = inlined_call_operand.vmem [shape: f32[512,16], index: 0, kind: input, shape index: {}]
  %s1 = inlined_call_operand.vmem [shape: f32[16,128], index: 1, kind: input, shape index: {}]
  %s2 = inlined_call_operand.vmem [shape: f32[1,128], index: 2, kind: input, shape index: {}]
  %s3 = inlined_call_operand.vmem [shape: f32[128,128], index: 3, kind: input, shape index: {}]
  %s4 = inlined_call_operand.vmem [shape: f32[1,128], index: 4, kind: input, shape index: {}]
  %s5 = inlined_call_operand.vmem [shape: f32[128,128], index: 5, kind: input, shape index: {}]
  %s6 = inlined_call_operand.vmem [shape: f32[1,128], index: 6, kind: input, shape index: {}]
  %s7 = inlined_call_operand.vmem [shape: f32[512,8], index: 7, kind: output, shape index: {}]
  %s8 = sld [smem:[#allocation0]]
  $region38: #{tpu_custom_call.1} parent=0
    _
  %s10 = ssub.s32 1, %s8
  %s11 = scalar_select 0, %s10, %s8
  // Predicated region
  $region2: #{tpu_custom_call.1} parent=0 // pred_check
    _
  $region3: #{tpu_custom_call.1} parent=0 // pred_check_branch
    %13 = sbr.rel (0) target = $region5
  $region4: #{tpu_custom_call.1} parent=0 // pred_region
    _
  $region5: #{tpu_custom_call.1} parent=0 // pred_fallthru
    _
  // Predicated region
  $region6: #{tpu_custom_call.1} parent=0 // pred_check
    _
  $region7: #{tpu_custom_call.1} parent=0 // pred_check_branch
    %15 = sbr.rel (0) target = $region9
  $region8: #{tpu_custom_call.1} parent=0 // pred_region
    _
  $region9: #{tpu_custom_call.1} parent=0 // pred_fallthru
    _
  // Predicated region
  $region10: #{tpu_custom_call.1} parent=0 // pred_check
    _
  $region11: #{tpu_custom_call.1} parent=0 // pred_check_branch
    %17 = sbr.rel (0) target = $region13
  $region12: #{tpu_custom_call.1} parent=0 // pred_region
    _
  $region13: #{tpu_custom_call.1} parent=0 // pred_fallthru
    _
  // Predicated region
  $region14: #{tpu_custom_call.1} parent=0 // pred_check
    _
  $region15: #{tpu_custom_call.1} parent=0 // pred_check_branch
    %19 = sbr.rel (0) target = $region17
  $region16: #{tpu_custom_call.1} parent=0 // pred_region
    _
  $region17: #{tpu_custom_call.1} parent=0 // pred_fallthru
    _
  // Predicated region
  $region18: #{tpu_custom_call.1} parent=0 // pred_check
    _
  $region19: #{tpu_custom_call.1} parent=0 // pred_check_branch
    %21 = sbr.rel (0) target = $region21
  $region20: #{tpu_custom_call.1} parent=0 // pred_region
    _
  $region21: #{tpu_custom_call.1} parent=0 // pred_fallthru
    _
  // Predicated region
  $region22: #{tpu_custom_call.1} parent=0 // pred_check
    _
  $region23: #{tpu_custom_call.1} parent=0 // pred_check_branch
    %23 = sbr.rel (0) target = $region25
  $region24: #{tpu_custom_call.1} parent=0 // pred_region
    _
  $region25: #{tpu_custom_call.1} parent=0 // pred_fallthru
    _
  // Predicated region
  $region26: #{tpu_custom_call.1} parent=0 // pred_check
    _
  $region27: #{tpu_custom_call.1} parent=0 // pred_check_branch
    %25 = sbr.rel (0) target = $region29
  $region28: #{tpu_custom_call.1} parent=0 // pred_region
    _
  $region29: #{tpu_custom_call.1} parent=0 // pred_fallthru
    _
  %v26 = vld [vmem:[%s0] sm:$0xff]
  %v27 = vld [vmem:[%s0 + $0x8] sm:$0xff]
  %v28 = vld [vmem:[%s0 + $0x10] sm:$0xff]
  %v29 = vld [vmem:[%s0 + $0x18] sm:$0xff]
  %v30 = vld [vmem:[%s0 + $0x20] sm:$0xff]
  %v31 = vld [vmem:[%s0 + $0x28] sm:$0xff]
  %v32 = vld [vmem:[%s0 + $0x30] sm:$0xff]
  %v33 = vld [vmem:[%s0 + $0x38] sm:$0xff]
  %v34 = vld [vmem:[%s0 + $0x40] sm:$0xff]
  %v35 = vld [vmem:[%s0 + $0x48] sm:$0xff]
  %v36 = vld [vmem:[%s0 + $0x50] sm:$0xff]
  %v37 = vld [vmem:[%s0 + $0x58] sm:$0xff]
  %v38 = vld [vmem:[%s0 + $0x60] sm:$0xff]
  %v39 = vld [vmem:[%s0 + $0x68] sm:$0xff]
  %v40 = vld [vmem:[%s0 + $0x70] sm:$0xff]
  %v41 = vld [vmem:[%s0 + $0x78] sm:$0xff]
  %v42 = vld [vmem:[%s0 + $0x80] sm:$0xff]
  %v43 = vld [vmem:[%s0 + $0x88] sm:$0xff]
  %v44 = vld [vmem:[%s0 + $0x90] sm:$0xff]
  %v45 = vld [vmem:[%s0 + $0x98] sm:$0xff]
  %v46 = vld [vmem:[%s0 + $0xa0] sm:$0xff]
  %v47 = vld [vmem:[%s0 + $0xa8] sm:$0xff]
  %v48 = vld [vmem:[%s0 + $0xb0] sm:$0xff]
  %v49 = vld [vmem:[%s0 + $0xb8] sm:$0xff]
  %v50 = vld [vmem:[%s0 + $0xc0] sm:$0xff]
  %v51 = vld [vmem:[%s0 + $0xc8] sm:$0xff]
  %v52 = vld [vmem:[%s0 + $0xd0] sm:$0xff]
  %v53 = vld [vmem:[%s0 + $0xd8] sm:$0xff]
  %v54 = vld [vmem:[%s0 + $0xe0] sm:$0xff]
  %v55 = vld [vmem:[%s0 + $0xe8] sm:$0xff]
  %v56 = vld [vmem:[%s0 + $0xf0] sm:$0xff]
  %v57 = vld [vmem:[%s0 + $0xf8] sm:$0xff]
  %v58 = vld [vmem:[%s0 + $0x100] sm:$0xff]
  %v59 = vld [vmem:[%s0 + $0x108] sm:$0xff]
  %v60 = vld [vmem:[%s0 + $0x110] sm:$0xff]
  %v61 = vld [vmem:[%s0 + $0x118] sm:$0xff]
  %v62 = vld [vmem:[%s0 + $0x120] sm:$0xff]
  %v63 = vld [vmem:[%s0 + $0x128] sm:$0xff]
  %v64 = vld [vmem:[%s0 + $0x130] sm:$0xff]
  %v65 = vld [vmem:[%s0 + $0x138] sm:$0xff]
  %v66 = vld [vmem:[%s0 + $0x140] sm:$0xff]
  %v67 = vld [vmem:[%s0 + $0x148] sm:$0xff]
  %v68 = vld [vmem:[%s0 + $0x150] sm:$0xff]
  %v69 = vld [vmem:[%s0 + $0x158] sm:$0xff]
  %v70 = vld [vmem:[%s0 + $0x160] sm:$0xff]
  %v71 = vld [vmem:[%s0 + $0x168] sm:$0xff]
  %v72 = vld [vmem:[%s0 + $0x170] sm:$0xff]
  %v73 = vld [vmem:[%s0 + $0x178] sm:$0xff]
  %v74 = vld [vmem:[%s0 + $0x180] sm:$0xff]
  %v75 = vld [vmem:[%s0 + $0x188] sm:$0xff]
  %v76 = vld [vmem:[%s0 + $0x190] sm:$0xff]
  %v77 = vld [vmem:[%s0 + $0x198] sm:$0xff]
  %v78 = vld [vmem:[%s0 + $0x1a0] sm:$0xff]
  %v79 = vld [vmem:[%s0 + $0x1a8] sm:$0xff]
  %v80 = vld [vmem:[%s0 + $0x1b0] sm:$0xff]
  %v81 = vld [vmem:[%s0 + $0x1b8] sm:$0xff]
  %v82 = vld [vmem:[%s0 + $0x1c0] sm:$0xff]
  %v83 = vld [vmem:[%s0 + $0x1c8] sm:$0xff]
  %v84 = vld [vmem:[%s0 + $0x1d0] sm:$0xff]
  %v85 = vld [vmem:[%s0 + $0x1d8] sm:$0xff]
  %v86 = vld [vmem:[%s0 + $0x1e0] sm:$0xff]
  %v87 = vld [vmem:[%s0 + $0x1e8] sm:$0xff]
  %v88 = vld [vmem:[%s0 + $0x1f0] sm:$0xff]
  %v89 = vld [vmem:[%s0 + $0x1f8] sm:$0xff]
  %v90 = vld [vmem:[%s1] sm:$0xff]
  %v91 = vld [vmem:[%s1 + $0x8] sm:$0xff]
  %v92 = vld [vmem:[%s2] sm:$0x1]
  %v94 = vlaneseq
  %v95 = vshrl.u32 %v94, 7
  %v96 = vsub.s32 0, %v95
  %v97 = vrot.slane %v92, %v96
  %vm99 = vcmask 130048
  %v101 = vsel %vm99, %v26, 0
  %v104 = vsel %vm99, %v27, 0
  %v107 = vsel %vm99, %v28, 0
  %v110 = vsel %vm99, %v29, 0
  %v113 = vsel %vm99, %v30, 0
  %v116 = vsel %vm99, %v31, 0
  %v119 = vsel %vm99, %v32, 0
  %v122 = vsel %vm99, %v33, 0
  %v125 = vsel %vm99, %v34, 0
  %v128 = vsel %vm99, %v35, 0
  %v131 = vsel %vm99, %v36, 0
  %v134 = vsel %vm99, %v37, 0
  %v137 = vsel %vm99, %v38, 0
  %v140 = vsel %vm99, %v39, 0
  %v143 = vsel %vm99, %v40, 0
  %v146 = vsel %vm99, %v41, 0
  %v149 = vsel %vm99, %v42, 0
  %v152 = vsel %vm99, %v43, 0
  %v155 = vsel %vm99, %v44, 0
  %v158 = vsel %vm99, %v45, 0
  %v161 = vsel %vm99, %v46, 0
  %v164 = vsel %vm99, %v47, 0
  %v167 = vsel %vm99, %v48, 0
  %v170 = vsel %vm99, %v49, 0
  %v173 = vsel %vm99, %v50, 0
  %v176 = vsel %vm99, %v51, 0
  %v179 = vsel %vm99, %v52, 0
  %v182 = vsel %vm99, %v53, 0
  %v185 = vsel %vm99, %v54, 0
  %v188 = vsel %vm99, %v55, 0
  %v191 = vsel %vm99, %v56, 0
  %v194 = vsel %vm99, %v57, 0
  %v197 = vsel %vm99, %v58, 0
  %v200 = vsel %vm99, %v59, 0
  %v203 = vsel %vm99, %v60, 0
  %v206 = vsel %vm99, %v61, 0
  %v209 = vsel %vm99, %v62, 0
  %v212 = vsel %vm99, %v63, 0
  %v215 = vsel %vm99, %v64, 0
  %v218 = vsel %vm99, %v65, 0
  %v221 = vsel %vm99, %v66, 0
  %v224 = vsel %vm99, %v67, 0
  %v227 = vsel %vm99, %v68, 0
  %v230 = vsel %vm99, %v69, 0
  %v233 = vsel %vm99, %v70, 0
  %v236 = vsel %vm99, %v71, 0
  %v239 = vsel %vm99, %v72, 0
  %v242 = vsel %vm99, %v73, 0
  %v245 = vsel %vm99, %v74, 0
  %v248 = vsel %vm99, %v75, 0
  %v251 = vsel %vm99, %v76, 0
  %v254 = vsel %vm99, %v77, 0
  %v257 = vsel %vm99, %v78, 0
  %v260 = vsel %vm99, %v79, 0
  %v263 = vsel %vm99, %v80, 0
  %v266 = vsel %vm99, %v81, 0
  %v269 = vsel %vm99, %v82, 0
  %v272 = vsel %vm99, %v83, 0
  %v275 = vsel %vm99, %v84, 0
  %v278 = vsel %vm99, %v85, 0
  %v281 = vsel %vm99, %v86, 0
  %v284 = vsel %vm99, %v87, 0
  %v287 = vsel %vm99, %v88, 0
  %v290 = vsel %vm99, %v89, 0
  %292 = vmatprep.subr.mxu0 0.0
  %293 = vmatpush1.msra.mxu0 %v90
  %294 = vmatprep.subr.mxu0 0.0
  %295 = vmatpush1.msra.mxu0 %v91
  %296 = vmatprep.subr.mxu0 0.0
  %297 = vmatpush1.msra.mxu0 0.0
  %298 = vmatprep.subr.mxu0 0.0
  %299 = vmatpush1.msra.mxu0 0.0
  %300 = vmatprep.subr.mxu0 0.0
  %301 = vmatpush1.msra.mxu0 0.0
  %302 = vmatprep.subr.mxu0 0.0
  %303 = vmatpush1.msra.mxu0 0.0
  %304 = vmatprep.subr.mxu0 0.0
  %305 = vmatpush1.msra.mxu0 0.0
  %306 = vmatprep.subr.mxu0 0.0
  %307 = vmatpush1.msra.mxu0 0.0
  %308 = vmatprep.subr.mxu0 0.0
  %309 = vmatpush1.msra.mxu0 0.0
  %310 = vmatprep.subr.mxu0 0.0
  %311 = vmatpush1.msra.mxu0 0.0
  %312 = vmatprep.subr.mxu0 0.0
  %313 = vmatpush1.msra.mxu0 0.0
  %314 = vmatprep.subr.mxu0 0.0
  %315 = vmatpush1.msra.mxu0 0.0
  %316 = vmatprep.subr.mxu0 0.0
  %317 = vmatpush1.msra.mxu0 0.0
  %318 = vmatprep.subr.mxu0 0.0
  %319 = vmatpush1.msra.mxu0 0.0
  %320 = vmatprep.subr.mxu0 0.0
  %321 = vmatpush1.msra.mxu0 0.0
  %322 = vmatprep.subr.mxu0 0.0
  %323 = vmatpush1.msra.mxu0 0.0
  %324 = vmatprep.subr.mxu0 0.0
  %325 = vmatpush1.msra.mxu0 0.0
  %326 = vmatprep.subr.mxu0 0.0
  %327 = vmatpush1.msra.mxu0 0.0
  %328 = vmatprep.subr.mxu0 0.0
  %329 = vmatpush1.msra.mxu0 0.0
  %330 = vmatprep.subr.mxu0 0.0
  %331 = vmatpush1.msra.mxu0 0.0
  %332 = vmatprep.subr.mxu0 0.0
  %333 = vmatpush1.msra.mxu0 0.0
  %334 = vmatprep.subr.mxu0 0.0
  %335 = vmatpush1.msra.mxu0 0.0
  %336 = vmatprep.subr.mxu0 0.0
  %337 = vmatpush1.msra.mxu0 0.0
  %338 = vmatprep.subr.mxu0 0.0
  %339 = vmatpush1.msra.mxu0 0.0
  %340 = vmatprep.subr.mxu0 0.0
  %341 = vmatpush1.msra.mxu0 0.0
  %342 = vmatprep.subr.mxu0 0.0
  %343 = vmatpush1.msra.mxu0 0.0
  %344 = vmatprep.subr.mxu0 0.0
  %345 = vmatpush1.msra.mxu0 0.0
  %346 = vmatprep.subr.mxu0 0.0
  %347 = vmatpush1.msra.mxu0 0.0
  %348 = vmatprep.subr.mxu0 0.0
  %349 = vmatpush1.msra.mxu0 0.0
  %350 = vmatprep.subr.mxu0 0.0
  %351 = vmatpush1.msra.mxu0 0.0
  %352 = vmatprep.subr.mxu0 0.0
  %353 = vmatpush1.msra.mxu0 0.0
  %354 = vmatprep.subr.mxu0 0.0
  %355 = vmatpush1.msra.mxu0 0.0
  %356 = vmatprep.mubr.f32.mxu0 0.0
  %357 = vmatmul.mubr.f32.gmra.mrb[0].mxu0 %v101
  %v358 = vpop.f32.mrb[0].mxu0
  %v359 = vadd.f32 %v97, %v358
  %v360 = vpop.f32.mrb[0].mxu0
  %361 = vmatprep.mubr.f32.mxu0 0.0
  %362 = vmatmul.mubr.f32.gmra.mrb[0].mxu0 %v104
  %v363 = vpop.f32.mrb[0].mxu0
  %v364 = vadd.f32 %v97, %v363
  %v365 = vpop.f32.mrb[0].mxu0
  %366 = vmatprep.mubr.f32.mxu0 0.0
  %367 = vmatmul.mubr.f32.gmra.mrb[0].mxu0 %v107
  %v368 = vpop.f32.mrb[0].mxu0
  %v369 = vadd.f32 %v97, %v368
  %v370 = vpop.f32.mrb[0].mxu0
  %371 = vmatprep.mubr.f32.mxu0 0.0
  %372 = vmatmul.mubr.f32.gmra.mrb[0].mxu0 %v110
  %v373 = vpop.f32.mrb[0].mxu0
  %v374 = vadd.f32 %v97, %v373
  %v375 = vpop.f32.mrb[0].mxu0
  %376 = vmatprep.mubr.f32.mxu0 0.0
  %377 = vmatmul.mubr.f32.gmra.mrb[0].mxu0 %v113
  %v378 = vpop.f32.mrb[0].mxu0
  %v379 = vadd.f32 %v97, %v378
  %v380 = vpop.f32.mrb[0].mxu0
  %381 = vmatprep.mubr.f32.mxu0 0.0
  %382 = vmatmul.mubr.f32.gmra.mrb[0].mxu0 %v116
  %v383 = vpop.f32.mrb[0].mxu0
  %v384 = vadd.f32 %v97, %v383
  %v385 = vpop.f32.mrb[0].mxu0
  %386 = vmatprep.mubr.f32.mxu0 0.0
  %387 = vmatmul.mubr.f32.gmra.mrb[0].mxu0 %v119
  %v388 = vpop.f32.mrb[0].mxu0
  %v389 = vadd.f32 %v97, %v388
  %v390 = vpop.f32.mrb[0].mxu0
  %391 = vmatprep.mubr.f32.mxu0 0.0
  %392 = vmatmul.mubr.f32.gmra.mrb[0].mxu0 %v122
  %v393 = vpop.f32.mrb[0].mxu0
  %v394 = vadd.f32 %v97, %v393
  %v395 = vpop.f32.mrb[0].mxu0
  %396 = vmatprep.mubr.f32.mxu0 0.0
  %397 = vmatmul.mubr.f32.gmra.mrb[0].mxu0 %v125
  %v398 = vpop.f32.mrb[0].mxu0
  %v399 = vadd.f32 %v97, %v398
  %v400 = vpop.f32.mrb[0].mxu0
  %401 = vmatprep.mubr.f32.mxu0 0.0
  %402 = vmatmul.mubr.f32.gmra.mrb[0].mxu0 %v128
  %v403 = vpop.f32.mrb[0].mxu0
  %v404 = vadd.f32 %v97, %v403
  %v405 = vpop.f32.mrb[0].mxu0
  %406 = vmatprep.mubr.f32.mxu0 0.0
  %407 = vmatmul.mubr.f32.gmra.mrb[0].mxu0 %v131
  %v408 = vpop.f32.mrb[0].mxu0
  %v409 = vadd.f32 %v97, %v408
  %v410 = vpop.f32.mrb[0].mxu0
  %411 = vmatprep.mubr.f32.mxu0 0.0
  %412 = vmatmul.mubr.f32.gmra.mrb[0].mxu0 %v134
  %v413 = vpop.f32.mrb[0].mxu0
  %v414 = vadd.f32 %v97, %v413
  %v415 = vpop.f32.mrb[0].mxu0
  %416 = vmatprep.mubr.f32.mxu0 0.0
  %417 = vmatmul.mubr.f32.gmra.mrb[0].mxu0 %v137
  %v418 = vpop.f32.mrb[0].mxu0
  %v419 = vadd.f32 %v97, %v418
  %v420 = vpop.f32.mrb[0].mxu0
  %421 = vmatprep.mubr.f32.mxu0 0.0
  %422 = vmatmul.mubr.f32.gmra.mrb[0].mxu0 %v140
  %v423 = vpop.f32.mrb[0].mxu0
  %v424 = vadd.f32 %v97, %v423
  %v425 = vpop.f32.mrb[0].mxu0
  %426 = vmatprep.mubr.f32.mxu0 0.0
  %427 = vmatmul.mubr.f32.gmra.mrb[0].mxu0 %v143
  %v428 = vpop.f32.mrb[0].mxu0
  %v429 = vadd.f32 %v97, %v428
  %v430 = vpop.f32.mrb[0].mxu0
  %431 = vmatprep.mubr.f32.mxu0 0.0
  %432 = vmatmul.mubr.f32.gmra.mrb[0].mxu0 %v146
  %v433 = vpop.f32.mrb[0].mxu0
  %v434 = vadd.f32 %v97, %v433
  %v435 = vpop.f32.mrb[0].mxu0
  %436 = vmatprep.mubr.f32.mxu0 0.0
  %437 = vmatmul.mubr.f32.gmra.mrb[0].mxu0 %v149
  %v438 = vpop.f32.mrb[0].mxu0
  %v439 = vadd.f32 %v97, %v438
  %v440 = vpop.f32.mrb[0].mxu0
  %441 = vmatprep.mubr.f32.mxu0 0.0
  %442 = vmatmul.mubr.f32.gmra.mrb[0].mxu0 %v152
  %v443 = vpop.f32.mrb[0].mxu0
  %v444 = vadd.f32 %v97, %v443
  %v445 = vpop.f32.mrb[0].mxu0
  %446 = vmatprep.mubr.f32.mxu0 0.0
  %447 = vmatmul.mubr.f32.gmra.mrb[0].mxu0 %v155
  %v448 = vpop.f32.mrb[0].mxu0
  %v449 = vadd.f32 %v97, %v448
  %v450 = vpop.f32.mrb[0].mxu0
  %451 = vmatprep.mubr.f32.mxu0 0.0
  %452 = vmatmul.mubr.f32.gmra.mrb[0].mxu0 %v158
  %v453 = vpop.f32.mrb[0].mxu0
  %v454 = vadd.f32 %v97, %v453
  %v455 = vpop.f32.mrb[0].mxu0
  %456 = vmatprep.mubr.f32.mxu0 0.0
  %457 = vmatmul.mubr.f32.gmra.mrb[0].mxu0 %v161
  %v458 = vpop.f32.mrb[0].mxu0
  %v459 = vadd.f32 %v97, %v458
  %v460 = vpop.f32.mrb[0].mxu0
  %461 = vmatprep.mubr.f32.mxu0 0.0
  %462 = vmatmul.mubr.f32.gmra.mrb[0].mxu0 %v164
  %v463 = vpop.f32.mrb[0].mxu0
  %v464 = vadd.f32 %v97, %v463
  %v465 = vpop.f32.mrb[0].mxu0
  %466 = vmatprep.mubr.f32.mxu0 0.0
  %467 = vmatmul.mubr.f32.gmra.mrb[0].mxu0 %v167
  %v468 = vpop.f32.mrb[0].mxu0
  %v469 = vadd.f32 %v97, %v468
  %v470 = vpop.f32.mrb[0].mxu0
  %471 = vmatprep.mubr.f32.mxu0 0.0
  %472 = vmatmul.mubr.f32.gmra.mrb[0].mxu0 %v170
  %v473 = vpop.f32.mrb[0].mxu0
  %v474 = vadd.f32 %v97, %v473
  %v475 = vpop.f32.mrb[0].mxu0
  %476 = vmatprep.mubr.f32.mxu0 0.0
  %477 = vmatmul.mubr.f32.gmra.mrb[0].mxu0 %v173
  %v478 = vpop.f32.mrb[0].mxu0
  %v479 = vadd.f32 %v97, %v478
  %v480 = vpop.f32.mrb[0].mxu0
  %481 = vmatprep.mubr.f32.mxu0 0.0
  %482 = vmatmul.mubr.f32.gmra.mrb[0].mxu0 %v176
  %v483 = vpop.f32.mrb[0].mxu0
  %v484 = vadd.f32 %v97, %v483
  %v485 = vpop.f32.mrb[0].mxu0
  %486 = vmatprep.mubr.f32.mxu0 0.0
  %487 = vmatmul.mubr.f32.gmra.mrb[0].mxu0 %v179
  %v488 = vpop.f32.mrb[0].mxu0
  %v489 = vadd.f32 %v97, %v488
  %v490 = vpop.f32.mrb[0].mxu0
  %491 = vmatprep.mubr.f32.mxu0 0.0
  %492 = vmatmul.mubr.f32.gmra.mrb[0].mxu0 %v182
  %v493 = vpop.f32.mrb[0].mxu0
  %v494 = vadd.f32 %v97, %v493
  %v495 = vpop.f32.mrb[0].mxu0
  %496 = vmatprep.mubr.f32.mxu0 0.0
  %497 = vmatmul.mubr.f32.gmra.mrb[0].mxu0 %v185
  %v498 = vpop.f32.mrb[0].mxu0
  %v499 = vadd.f32 %v97, %v498
  %v500 = vpop.f32.mrb[0].mxu0
  %501 = vmatprep.mubr.f32.mxu0 0.0
  %502 = vmatmul.mubr.f32.gmra.mrb[0].mxu0 %v188
  %v503 = vpop.f32.mrb[0].mxu0
  %v504 = vadd.f32 %v97, %v503
  %v505 = vpop.f32.mrb[0].mxu0
  %506 = vmatprep.mubr.f32.mxu0 0.0
  %507 = vmatmul.mubr.f32.gmra.mrb[0].mxu0 %v191
  %v508 = vpop.f32.mrb[0].mxu0
  %v509 = vadd.f32 %v97, %v508
  %v510 = vpop.f32.mrb[0].mxu0
  %511 = vmatprep.mubr.f32.mxu0 0.0
  %512 = vmatmul.mubr.f32.gmra.mrb[0].mxu0 %v194
  %v513 = vpop.f32.mrb[0].mxu0
  %v514 = vadd.f32 %v97, %v513
  %v515 = vpop.f32.mrb[0].mxu0
  %516 = vmatprep.mubr.f32.mxu0 0.0
  %517 = vmatmul.mubr.f32.gmra.mrb[0].mxu0 %v197
  %v518 = vpop.f32.mrb[0].mxu0
  %v519 = vadd.f32 %v97, %v518
  %v520 = vpop.f32.mrb[0].mxu0
  %521 = vmatprep.mubr.f32.mxu0 0.0
  %522 = vmatmul.mubr.f32.gmra.mrb[0].mxu0 %v200
  %v523 = vpop.f32.mrb[0].mxu0
  %v524 = vadd.f32 %v97, %v523
  %v525 = vpop.f32.mrb[0].mxu0
  %526 = vmatprep.mubr.f32.mxu0 0.0
  %527 = vmatmul.mubr.f32.gmra.mrb[0].mxu0 %v203
  %v528 = vpop.f32.mrb[0].mxu0
  %v529 = vadd.f32 %v97, %v528
  %v530 = vpop.f32.mrb[0].mxu0
  %531 = vmatprep.mubr.f32.mxu0 0.0
  %532 = vmatmul.mubr.f32.gmra.mrb[0].mxu0 %v206
  %v533 = vpop.f32.mrb[0].mxu0
  %v534 = vadd.f32 %v97, %v533
  %v535 = vpop.f32.mrb[0].mxu0
  %536 = vmatprep.mubr.f32.mxu0 0.0
  %537 = vmatmul.mubr.f32.gmra.mrb[0].mxu0 %v209
  %v538 = vpop.f32.mrb[0].mxu0
  %v539 = vadd.f32 %v97, %v538
  %v540 = vpop.f32.mrb[0].mxu0
  %541 = vmatprep.mubr.f32.mxu0 0.0
  %542 = vmatmul.mubr.f32.gmra.mrb[0].mxu0 %v212
  %v543 = vpop.f32.mrb[0].mxu0
  %v544 = vadd.f32 %v97, %v543
  %v545 = vpop.f32.mrb[0].mxu0
  %546 = vmatprep.mubr.f32.mxu0 0.0
  %547 = vmatmul.mubr.f32.gmra.mrb[0].mxu0 %v215
  %v548 = vpop.f32.mrb[0].mxu0
  %v549 = vadd.f32 %v97, %v548
  %v550 = vpop.f32.mrb[0].mxu0
  %551 = vmatprep.mubr.f32.mxu0 0.0
  %552 = vmatmul.mubr.f32.gmra.mrb[0].mxu0 %v218
  %v553 = vpop.f32.mrb[0].mxu0
  %v554 = vadd.f32 %v97, %v553
  %v555 = vpop.f32.mrb[0].mxu0
  %556 = vmatprep.mubr.f32.mxu0 0.0
  %557 = vmatmul.mubr.f32.gmra.mrb[0].mxu0 %v221
  %v558 = vpop.f32.mrb[0].mxu0
  %v559 = vadd.f32 %v97, %v558
  %v560 = vpop.f32.mrb[0].mxu0
  %561 = vmatprep.mubr.f32.mxu0 0.0
  %562 = vmatmul.mubr.f32.gmra.mrb[0].mxu0 %v224
  %v563 = vpop.f32.mrb[0].mxu0
  %v564 = vadd.f32 %v97, %v563
  %v565 = vpop.f32.mrb[0].mxu0
  %566 = vmatprep.mubr.f32.mxu0 0.0
  %567 = vmatmul.mubr.f32.gmra.mrb[0].mxu0 %v227
  %v568 = vpop.f32.mrb[0].mxu0
  %v569 = vadd.f32 %v97, %v568
  %v570 = vpop.f32.mrb[0].mxu0
  %571 = vmatprep.mubr.f32.mxu0 0.0
  %572 = vmatmul.mubr.f32.gmra.mrb[0].mxu0 %v230
  %v573 = vpop.f32.mrb[0].mxu0
  %v574 = vadd.f32 %v97, %v573
  %v575 = vpop.f32.mrb[0].mxu0
  %576 = vmatprep.mubr.f32.mxu0 0.0
  %577 = vmatmul.mubr.f32.gmra.mrb[0].mxu0 %v233
  %v578 = vpop.f32.mrb[0].mxu0
  %v579 = vadd.f32 %v97, %v578
  %v580 = vpop.f32.mrb[0].mxu0
  %581 = vmatprep.mubr.f32.mxu0 0.0
  %582 = vmatmul.mubr.f32.gmra.mrb[0].mxu0 %v236
  %v583 = vpop.f32.mrb[0].mxu0
  %v584 = vadd.f32 %v97, %v583
  %v585 = vpop.f32.mrb[0].mxu0
  %586 = vmatprep.mubr.f32.mxu0 0.0
  %587 = vmatmul.mubr.f32.gmra.mrb[0].mxu0 %v239
  %v588 = vpop.f32.mrb[0].mxu0
  %v589 = vadd.f32 %v97, %v588
  %v590 = vpop.f32.mrb[0].mxu0
  %591 = vmatprep.mubr.f32.mxu0 0.0
  %592 = vmatmul.mubr.f32.gmra.mrb[0].mxu0 %v242
  %v593 = vpop.f32.mrb[0].mxu0
  %v594 = vadd.f32 %v97, %v593
  %v595 = vpop.f32.mrb[0].mxu0
  %596 = vmatprep.mubr.f32.mxu0 0.0
  %597 = vmatmul.mubr.f32.gmra.mrb[0].mxu0 %v245
  %v598 = vpop.f32.mrb[0].mxu0
  %v599 = vadd.f32 %v97, %v598
  %v600 = vpop.f32.mrb[0].mxu0
  %601 = vmatprep.mubr.f32.mxu0 0.0
  %602 = vmatmul.mubr.f32.gmra.mrb[0].mxu0 %v248
  %v603 = vpop.f32.mrb[0].mxu0
  %v604 = vadd.f32 %v97, %v603
  %v605 = vpop.f32.mrb[0].mxu0
  %606 = vmatprep.mubr.f32.mxu0 0.0
  %607 = vmatmul.mubr.f32.gmra.mrb[0].mxu0 %v251
  %v608 = vpop.f32.mrb[0].mxu0
  %v609 = vadd.f32 %v97, %v608
  %v610 = vpop.f32.mrb[0].mxu0
  %611 = vmatprep.mubr.f32.mxu0 0.0
  %612 = vmatmul.mubr.f32.gmra.mrb[0].mxu0 %v254
  %v613 = vpop.f32.mrb[0].mxu0
  %v614 = vadd.f32 %v97, %v613
  %v615 = vpop.f32.mrb[0].mxu0
  %616 = vmatprep.mubr.f32.mxu0 0.0
  %617 = vmatmul.mubr.f32.gmra.mrb[0].mxu0 %v257
  %v618 = vpop.f32.mrb[0].mxu0
  %v619 = vadd.f32 %v97, %v618
  %v620 = vpop.f32.mrb[0].mxu0
  %621 = vmatprep.mubr.f32.mxu0 0.0
  %622 = vmatmul.mubr.f32.gmra.mrb[0].mxu0 %v260
  %v623 = vpop.f32.mrb[0].mxu0
  %v624 = vadd.f32 %v97, %v623
  %v625 = vpop.f32.mrb[0].mxu0
  %626 = vmatprep.mubr.f32.mxu0 0.0
  %627 = vmatmul.mubr.f32.gmra.mrb[0].mxu0 %v263
  %v628 = vpop.f32.mrb[0].mxu0
  %v629 = vadd.f32 %v97, %v628
  %v630 = vpop.f32.mrb[0].mxu0
  %631 = vmatprep.mubr.f32.mxu0 0.0
  %632 = vmatmul.mubr.f32.gmra.mrb[0].mxu0 %v266
  %v633 = vpop.f32.mrb[0].mxu0
  %v634 = vadd.f32 %v97, %v633
  %v635 = vpop.f32.mrb[0].mxu0
  %636 = vmatprep.mubr.f32.mxu0 0.0
  %637 = vmatmul.mubr.f32.gmra.mrb[0].mxu0 %v269
  %v638 = vpop.f32.mrb[0].mxu0
  %v639 = vadd.f32 %v97, %v638
  %v640 = vpop.f32.mrb[0].mxu0
  %641 = vmatprep.mubr.f32.mxu0 0.0
  %642 = vmatmul.mubr.f32.gmra.mrb[0].mxu0 %v272
  %v643 = vpop.f32.mrb[0].mxu0
  %v644 = vadd.f32 %v97, %v643
  %v645 = vpop.f32.mrb[0].mxu0
  %646 = vmatprep.mubr.f32.mxu0 0.0
  %647 = vmatmul.mubr.f32.gmra.mrb[0].mxu0 %v275
  %v648 = vpop.f32.mrb[0].mxu0
  %v649 = vadd.f32 %v97, %v648
  %v650 = vpop.f32.mrb[0].mxu0
  %651 = vmatprep.mubr.f32.mxu0 0.0
  %652 = vmatmul.mubr.f32.gmra.mrb[0].mxu0 %v278
  %v653 = vpop.f32.mrb[0].mxu0
  %v654 = vadd.f32 %v97, %v653
  %v655 = vpop.f32.mrb[0].mxu0
  %656 = vmatprep.mubr.f32.mxu0 0.0
  %657 = vmatmul.mubr.f32.gmra.mrb[0].mxu0 %v281
  %v658 = vpop.f32.mrb[0].mxu0
  %v659 = vadd.f32 %v97, %v658
  %v660 = vpop.f32.mrb[0].mxu0
  %661 = vmatprep.mubr.f32.mxu0 0.0
  %662 = vmatmul.mubr.f32.gmra.mrb[0].mxu0 %v284
  %v663 = vpop.f32.mrb[0].mxu0
  %v664 = vadd.f32 %v97, %v663
  %v665 = vpop.f32.mrb[0].mxu0
  %666 = vmatprep.mubr.f32.mxu0 0.0
  %667 = vmatmul.mubr.f32.gmra.mrb[0].mxu0 %v287
  %v668 = vpop.f32.mrb[0].mxu0
  %v669 = vadd.f32 %v97, %v668
  %v670 = vpop.f32.mrb[0].mxu0
  %671 = vmatprep.mubr.f32.mxu0 0.0
  %672 = vmatmul.mubr.f32.gmra.mrb[0].mxu0 %v290
  %v673 = vpop.f32.mrb[0].mxu0
  %v674 = vadd.f32 %v97, %v673
  %v675 = vpop.f32.mrb[0].mxu0
  %676 = vdwg.mxu0
  %v677 = vmax.f32 %v359, 0.0
  %v678 = vmax.f32 %v364, 0.0
  %v679 = vmax.f32 %v369, 0.0
  %v680 = vmax.f32 %v374, 0.0
  %v681 = vmax.f32 %v379, 0.0
  %v682 = vmax.f32 %v384, 0.0
  %v683 = vmax.f32 %v389, 0.0
  %v684 = vmax.f32 %v394, 0.0
  %v685 = vmax.f32 %v399, 0.0
  %v686 = vmax.f32 %v404, 0.0
  %v687 = vmax.f32 %v409, 0.0
  %v688 = vmax.f32 %v414, 0.0
  %v689 = vmax.f32 %v419, 0.0
  %v690 = vmax.f32 %v424, 0.0
  %v691 = vmax.f32 %v429, 0.0
  %v692 = vmax.f32 %v434, 0.0
  %v693 = vmax.f32 %v439, 0.0
  %v694 = vmax.f32 %v444, 0.0
  %v695 = vmax.f32 %v449, 0.0
  %v696 = vmax.f32 %v454, 0.0
  %v697 = vmax.f32 %v459, 0.0
  %v698 = vmax.f32 %v464, 0.0
  %v699 = vmax.f32 %v469, 0.0
  %v700 = vmax.f32 %v474, 0.0
  %v701 = vmax.f32 %v479, 0.0
  %v702 = vmax.f32 %v484, 0.0
  %v703 = vmax.f32 %v489, 0.0
  %v704 = vmax.f32 %v494, 0.0
  %v705 = vmax.f32 %v499, 0.0
  %v706 = vmax.f32 %v504, 0.0
  %v707 = vmax.f32 %v509, 0.0
  %v708 = vmax.f32 %v514, 0.0
  %v709 = vmax.f32 %v519, 0.0
  %v710 = vmax.f32 %v524, 0.0
  %v711 = vmax.f32 %v529, 0.0
  %v712 = vmax.f32 %v534, 0.0
  %v713 = vmax.f32 %v539, 0.0
  %v714 = vmax.f32 %v544, 0.0
  %v715 = vmax.f32 %v549, 0.0
  %v716 = vmax.f32 %v554, 0.0
  %v717 = vmax.f32 %v559, 0.0
  %v718 = vmax.f32 %v564, 0.0
  %v719 = vmax.f32 %v569, 0.0
  %v720 = vmax.f32 %v574, 0.0
  %v721 = vmax.f32 %v579, 0.0
  %v722 = vmax.f32 %v584, 0.0
  %v723 = vmax.f32 %v589, 0.0
  %v724 = vmax.f32 %v594, 0.0
  %v725 = vmax.f32 %v599, 0.0
  %v726 = vmax.f32 %v604, 0.0
  %v727 = vmax.f32 %v609, 0.0
  %v728 = vmax.f32 %v614, 0.0
  %v729 = vmax.f32 %v619, 0.0
  %v730 = vmax.f32 %v624, 0.0
  %v731 = vmax.f32 %v629, 0.0
  %v732 = vmax.f32 %v634, 0.0
  %v733 = vmax.f32 %v639, 0.0
  %v734 = vmax.f32 %v644, 0.0
  %v735 = vmax.f32 %v649, 0.0
  %v736 = vmax.f32 %v654, 0.0
  %v737 = vmax.f32 %v659, 0.0
  %v738 = vmax.f32 %v664, 0.0
  %v739 = vmax.f32 %v669, 0.0
  %v740 = vmax.f32 %v674, 0.0
  %v741 = vld [vmem:[%s3] sm:$0xff]
  %v742 = vld [vmem:[%s3 + $0x8] sm:$0xff]
  %v743 = vld [vmem:[%s3 + $0x10] sm:$0xff]
  %v744 = vld [vmem:[%s3 + $0x18] sm:$0xff]
  %v745 = vld [vmem:[%s3 + $0x20] sm:$0xff]
  %v746 = vld [vmem:[%s3 + $0x28] sm:$0xff]
  %v747 = vld [vmem:[%s3 + $0x30] sm:$0xff]
  %v748 = vld [vmem:[%s3 + $0x38] sm:$0xff]
  %v749 = vld [vmem:[%s3 + $0x40] sm:$0xff]
  %v750 = vld [vmem:[%s3 + $0x48] sm:$0xff]
  %v751 = vld [vmem:[%s3 + $0x50] sm:$0xff]
  %v752 = vld [vmem:[%s3 + $0x58] sm:$0xff]
  %v753 = vld [vmem:[%s3 + $0x60] sm:$0xff]
  %v754 = vld [vmem:[%s3 + $0x68] sm:$0xff]
  %v755 = vld [vmem:[%s3 + $0x70] sm:$0xff]
  %v756 = vld [vmem:[%s3 + $0x78] sm:$0xff]
  %v757 = vld [vmem:[%s4] sm:$0x1]
  %v759 = vlaneseq
  %v760 = vshrl.u32 %v759, 7
  %v761 = vsub.s32 0, %v760
  %v762 = vrot.slane %v757, %v761
  %764 = vmatprep.subr.mxu0 0.0
  %765 = vmatpush1.msra.mxu0 %v741
  %766 = vmatprep.subr.mxu0 0.0
  %767 = vmatpush1.msra.mxu0 %v742
  %768 = vmatprep.subr.mxu0 0.0
  %769 = vmatpush1.msra.mxu0 %v743
  %770 = vmatprep.subr.mxu0 0.0
  %771 = vmatpush1.msra.mxu0 %v744
  %772 = vmatprep.subr.mxu0 0.0
  %773 = vmatpush1.msra.mxu0 %v745
  %774 = vmatprep.subr.mxu0 0.0
  %775 = vmatpush1.msra.mxu0 %v746
  %776 = vmatprep.subr.mxu0 0.0
  %777 = vmatpush1.msra.mxu0 %v747
  %778 = vmatprep.subr.mxu0 0.0
  %779 = vmatpush1.msra.mxu0 %v748
  %780 = vmatprep.subr.mxu0 0.0
  %781 = vmatpush1.msra.mxu0 %v749
  %782 = vmatprep.subr.mxu0 0.0
  %783 = vmatpush1.msra.mxu0 %v750
  %784 = vmatprep.subr.mxu0 0.0
  %785 = vmatpush1.msra.mxu0 %v751
  %786 = vmatprep.subr.mxu0 0.0
  %787 = vmatpush1.msra.mxu0 %v752
  %788 = vmatprep.subr.mxu0 0.0
  %789 = vmatpush1.msra.mxu0 %v753
  %790 = vmatprep.subr.mxu0 0.0
  %791 = vmatpush1.msra.mxu0 %v754
  %792 = vmatprep.subr.mxu0 0.0
  %793 = vmatpush1.msra.mxu0 %v755
  %794 = vmatprep.subr.mxu0 0.0
  %795 = vmatpush1.msra.mxu0 %v756
  %796 = vmatprep.subr.mxu0 0.0
  %797 = vmatpush1.msra.mxu0 0.0
  %798 = vmatprep.subr.mxu0 0.0
  %799 = vmatpush1.msra.mxu0 0.0
  %800 = vmatprep.subr.mxu0 0.0
  %801 = vmatpush1.msra.mxu0 0.0
  %802 = vmatprep.subr.mxu0 0.0
  %803 = vmatpush1.msra.mxu0 0.0
  %804 = vmatprep.subr.mxu0 0.0
  %805 = vmatpush1.msra.mxu0 0.0
  %806 = vmatprep.subr.mxu0 0.0
  %807 = vmatpush1.msra.mxu0 0.0
  %808 = vmatprep.subr.mxu0 0.0
  %809 = vmatpush1.msra.mxu0 0.0
  %810 = vmatprep.subr.mxu0 0.0
  %811 = vmatpush1.msra.mxu0 0.0
  %812 = vmatprep.subr.mxu0 0.0
  %813 = vmatpush1.msra.mxu0 0.0
  %814 = vmatprep.subr.mxu0 0.0
  %815 = vmatpush1.msra.mxu0 0.0
  %816 = vmatprep.subr.mxu0 0.0
  %817 = vmatpush1.msra.mxu0 0.0
  %818 = vmatprep.subr.mxu0 0.0
  %819 = vmatpush1.msra.mxu0 0.0
  %820 = vmatprep.subr.mxu0 0.0
  %821 = vmatpush1.msra.mxu0 0.0
  %822 = vmatprep.subr.mxu0 0.0
  %823 = vmatpush1.msra.mxu0 0.0
  %824 = vmatprep.subr.mxu0 0.0
  %825 = vmatpush1.msra.mxu0 0.0
  %826 = vmatprep.subr.mxu0 0.0
  %827 = vmatpush1.msra.mxu0 0.0
  %828 = vmatprep.mubr.f32.mxu0 0.0
  %829 = vmatmul.mubr.f32.gmra.mrb[0].mxu0 %v677
  %v830 = vpop.f32.mrb[0].mxu0
  %v831 = vadd.f32 %v762, %v830
  %v832 = vpop.f32.mrb[0].mxu0
  %833 = vmatprep.mubr.f32.mxu0 0.0
  %834 = vmatmul.mubr.f32.gmra.mrb[0].mxu0 %v678
  %v835 = vpop.f32.mrb[0].mxu0
  %v836 = vadd.f32 %v762, %v835
  %v837 = vpop.f32.mrb[0].mxu0
  %838 = vmatprep.mubr.f32.mxu0 0.0
  %839 = vmatmul.mubr.f32.gmra.mrb[0].mxu0 %v679
  %v840 = vpop.f32.mrb[0].mxu0
  %v841 = vadd.f32 %v762, %v840
  %v842 = vpop.f32.mrb[0].mxu0
  %843 = vmatprep.mubr.f32.mxu0 0.0
  %844 = vmatmul.mubr.f32.gmra.mrb[0].mxu0 %v680
  %v845 = vpop.f32.mrb[0].mxu0
  %v846 = vadd.f32 %v762, %v845
  %v847 = vpop.f32.mrb[0].mxu0
  %848 = vmatprep.mubr.f32.mxu0 0.0
  %849 = vmatmul.mubr.f32.gmra.mrb[0].mxu0 %v681
  %v850 = vpop.f32.mrb[0].mxu0
  %v851 = vadd.f32 %v762, %v850
  %v852 = vpop.f32.mrb[0].mxu0
  %853 = vmatprep.mubr.f32.mxu0 0.0
  %854 = vmatmul.mubr.f32.gmra.mrb[0].mxu0 %v682
  %v855 = vpop.f32.mrb[0].mxu0
  %v856 = vadd.f32 %v762, %v855
  %v857 = vpop.f32.mrb[0].mxu0
  %858 = vmatprep.mubr.f32.mxu0 0.0
  %859 = vmatmul.mubr.f32.gmra.mrb[0].mxu0 %v683
  %v860 = vpop.f32.mrb[0].mxu0
  %v861 = vadd.f32 %v762, %v860
  %v862 = vpop.f32.mrb[0].mxu0
  %863 = vmatprep.mubr.f32.mxu0 0.0
  %864 = vmatmul.mubr.f32.gmra.mrb[0].mxu0 %v684
  %v865 = vpop.f32.mrb[0].mxu0
  %v866 = vadd.f32 %v762, %v865
  %v867 = vpop.f32.mrb[0].mxu0
  %868 = vmatprep.mubr.f32.mxu0 0.0
  %869 = vmatmul.mubr.f32.gmra.mrb[0].mxu0 %v685
  %v870 = vpop.f32.mrb[0].mxu0
  %v871 = vadd.f32 %v762, %v870
  %v872 = vpop.f32.mrb[0].mxu0
  %873 = vmatprep.mubr.f32.mxu0 0.0
  %874 = vmatmul.mubr.f32.gmra.mrb[0].mxu0 %v686
  %v875 = vpop.f32.mrb[0].mxu0
  %v876 = vadd.f32 %v762, %v875
  %v877 = vpop.f32.mrb[0].mxu0
  %878 = vmatprep.mubr.f32.mxu0 0.0
  %879 = vmatmul.mubr.f32.gmra.mrb[0].mxu0 %v687
  %v880 = vpop.f32.mrb[0].mxu0
  %v881 = vadd.f32 %v762, %v880
  %v882 = vpop.f32.mrb[0].mxu0
  %883 = vmatprep.mubr.f32.mxu0 0.0
  %884 = vmatmul.mubr.f32.gmra.mrb[0].mxu0 %v688
  %v885 = vpop.f32.mrb[0].mxu0
  %v886 = vadd.f32 %v762, %v885
  %v887 = vpop.f32.mrb[0].mxu0
  %888 = vmatprep.mubr.f32.mxu0 0.0
  %889 = vmatmul.mubr.f32.gmra.mrb[0].mxu0 %v689
  %v890 = vpop.f32.mrb[0].mxu0
  %v891 = vadd.f32 %v762, %v890
  %v892 = vpop.f32.mrb[0].mxu0
  %893 = vmatprep.mubr.f32.mxu0 0.0
  %894 = vmatmul.mubr.f32.gmra.mrb[0].mxu0 %v690
  %v895 = vpop.f32.mrb[0].mxu0
  %v896 = vadd.f32 %v762, %v895
  %v897 = vpop.f32.mrb[0].mxu0
  %898 = vmatprep.mubr.f32.mxu0 0.0
  %899 = vmatmul.mubr.f32.gmra.mrb[0].mxu0 %v691
  %v900 = vpop.f32.mrb[0].mxu0
  %v901 = vadd.f32 %v762, %v900
  %v902 = vpop.f32.mrb[0].mxu0
  %903 = vmatprep.mubr.f32.mxu0 0.0
  %904 = vmatmul.mubr.f32.gmra.mrb[0].mxu0 %v692
  %v905 = vpop.f32.mrb[0].mxu0
  %v906 = vadd.f32 %v762, %v905
  %v907 = vpop.f32.mrb[0].mxu0
  %908 = vmatprep.mubr.f32.mxu0 0.0
  %909 = vmatmul.mubr.f32.gmra.mrb[0].mxu0 %v693
  %v910 = vpop.f32.mrb[0].mxu0
  %v911 = vadd.f32 %v762, %v910
  %v912 = vpop.f32.mrb[0].mxu0
  %913 = vmatprep.mubr.f32.mxu0 0.0
  %914 = vmatmul.mubr.f32.gmra.mrb[0].mxu0 %v694
  %v915 = vpop.f32.mrb[0].mxu0
  %v916 = vadd.f32 %v762, %v915
  %v917 = vpop.f32.mrb[0].mxu0
  %918 = vmatprep.mubr.f32.mxu0 0.0
  %919 = vmatmul.mubr.f32.gmra.mrb[0].mxu0 %v695
  %v920 = vpop.f32.mrb[0].mxu0
  %v921 = vadd.f32 %v762, %v920
  %v922 = vpop.f32.mrb[0].mxu0
  %923 = vmatprep.mubr.f32.mxu0 0.0
  %924 = vmatmul.mubr.f32.gmra.mrb[0].mxu0 %v696
  %v925 = vpop.f32.mrb[0].mxu0
  %v926 = vadd.f32 %v762, %v925
  %v927 = vpop.f32.mrb[0].mxu0
  %928 = vmatprep.mubr.f32.mxu0 0.0
  %929 = vmatmul.mubr.f32.gmra.mrb[0].mxu0 %v697
  %v930 = vpop.f32.mrb[0].mxu0
  %v931 = vadd.f32 %v762, %v930
  %v932 = vpop.f32.mrb[0].mxu0
  %933 = vmatprep.mubr.f32.mxu0 0.0
  %934 = vmatmul.mubr.f32.gmra.mrb[0].mxu0 %v698
  %v935 = vpop.f32.mrb[0].mxu0
  %v936 = vadd.f32 %v762, %v935
  %v937 = vpop.f32.mrb[0].mxu0
  %938 = vmatprep.mubr.f32.mxu0 0.0
  %939 = vmatmul.mubr.f32.gmra.mrb[0].mxu0 %v699
  %v940 = vpop.f32.mrb[0].mxu0
  %v941 = vadd.f32 %v762, %v940
  %v942 = vpop.f32.mrb[0].mxu0
  %943 = vmatprep.mubr.f32.mxu0 0.0
  %944 = vmatmul.mubr.f32.gmra.mrb[0].mxu0 %v700
  %v945 = vpop.f32.mrb[0].mxu0
  %v946 = vadd.f32 %v762, %v945
  %v947 = vpop.f32.mrb[0].mxu0
  %948 = vmatprep.mubr.f32.mxu0 0.0
  %949 = vmatmul.mubr.f32.gmra.mrb[0].mxu0 %v701
  %v950 = vpop.f32.mrb[0].mxu0
  %v951 = vadd.f32 %v762, %v950
  %v952 = vpop.f32.mrb[0].mxu0
  %953 = vmatprep.mubr.f32.mxu0 0.0
  %954 = vmatmul.mubr.f32.gmra.mrb[0].mxu0 %v702
  %v955 = vpop.f32.mrb[0].mxu0
  %v956 = vadd.f32 %v762, %v955
  %v957 = vpop.f32.mrb[0].mxu0
  %958 = vmatprep.mubr.f32.mxu0 0.0
  %959 = vmatmul.mubr.f32.gmra.mrb[0].mxu0 %v703
  %v960 = vpop.f32.mrb[0].mxu0
  %v961 = vadd.f32 %v762, %v960
  %v962 = vpop.f32.mrb[0].mxu0
  %963 = vmatprep.mubr.f32.mxu0 0.0
  %964 = vmatmul.mubr.f32.gmra.mrb[0].mxu0 %v704
  %v965 = vpop.f32.mrb[0].mxu0
  %v966 = vadd.f32 %v762, %v965
  %v967 = vpop.f32.mrb[0].mxu0
  %968 = vmatprep.mubr.f32.mxu0 0.0
  %969 = vmatmul.mubr.f32.gmra.mrb[0].mxu0 %v705
  %v970 = vpop.f32.mrb[0].mxu0
  %v971 = vadd.f32 %v762, %v970
  %v972 = vpop.f32.mrb[0].mxu0
  %973 = vmatprep.mubr.f32.mxu0 0.0
  %974 = vmatmul.mubr.f32.gmra.mrb[0].mxu0 %v706
  %v975 = vpop.f32.mrb[0].mxu0
  %v976 = vadd.f32 %v762, %v975
  %v977 = vpop.f32.mrb[0].mxu0
  %978 = vmatprep.mubr.f32.mxu0 0.0
  %979 = vmatmul.mubr.f32.gmra.mrb[0].mxu0 %v707
  %v980 = vpop.f32.mrb[0].mxu0
  %v981 = vadd.f32 %v762, %v980
  %v982 = vpop.f32.mrb[0].mxu0
  %983 = vmatprep.mubr.f32.mxu0 0.0
  %984 = vmatmul.mubr.f32.gmra.mrb[0].mxu0 %v708
  %v985 = vpop.f32.mrb[0].mxu0
  %v986 = vadd.f32 %v762, %v985
  %v987 = vpop.f32.mrb[0].mxu0
  %988 = vmatprep.mubr.f32.mxu0 0.0
  %989 = vmatmul.mubr.f32.gmra.mrb[0].mxu0 %v709
  %v990 = vpop.f32.mrb[0].mxu0
  %v991 = vadd.f32 %v762, %v990
  %v992 = vpop.f32.mrb[0].mxu0
  %993 = vmatprep.mubr.f32.mxu0 0.0
  %994 = vmatmul.mubr.f32.gmra.mrb[0].mxu0 %v710
  %v995 = vpop.f32.mrb[0].mxu0
  %v996 = vadd.f32 %v762, %v995
  %v997 = vpop.f32.mrb[0].mxu0
  %998 = vmatprep.mubr.f32.mxu0 0.0
  %999 = vmatmul.mubr.f32.gmra.mrb[0].mxu0 %v711
  %v1000 = vpop.f32.mrb[0].mxu0
  %v1001 = vadd.f32 %v762, %v1000
  %v1002 = vpop.f32.mrb[0].mxu0
  %1003 = vmatprep.mubr.f32.mxu0 0.0
  %1004 = vmatmul.mubr.f32.gmra.mrb[0].mxu0 %v712
  %v1005 = vpop.f32.mrb[0].mxu0
  %v1006 = vadd.f32 %v762, %v1005
  %v1007 = vpop.f32.mrb[0].mxu0
  %1008 = vmatprep.mubr.f32.mxu0 0.0
  %1009 = vmatmul.mubr.f32.gmra.mrb[0].mxu0 %v713
  %v1010 = vpop.f32.mrb[0].mxu0
  %v1011 = vadd.f32 %v762, %v1010
  %v1012 = vpop.f32.mrb[0].mxu0
  %1013 = vmatprep.mubr.f32.mxu0 0.0
  %1014 = vmatmul.mubr.f32.gmra.mrb[0].mxu0 %v714
  %v1015 = vpop.f32.mrb[0].mxu0
  %v1016 = vadd.f32 %v762, %v1015
  %v1017 = vpop.f32.mrb[0].mxu0
  %1018 = vmatprep.mubr.f32.mxu0 0.0
  %1019 = vmatmul.mubr.f32.gmra.mrb[0].mxu0 %v715
  %v1020 = vpop.f32.mrb[0].mxu0
  %v1021 = vadd.f32 %v762, %v1020
  %v1022 = vpop.f32.mrb[0].mxu0
  %1023 = vmatprep.mubr.f32.mxu0 0.0
  %1024 = vmatmul.mubr.f32.gmra.mrb[0].mxu0 %v716
  %v1025 = vpop.f32.mrb[0].mxu0
  %v1026 = vadd.f32 %v762, %v1025
  %v1027 = vpop.f32.mrb[0].mxu0
  %1028 = vmatprep.mubr.f32.mxu0 0.0
  %1029 = vmatmul.mubr.f32.gmra.mrb[0].mxu0 %v717
  %v1030 = vpop.f32.mrb[0].mxu0
  %v1031 = vadd.f32 %v762, %v1030
  %v1032 = vpop.f32.mrb[0].mxu0
  %1033 = vmatprep.mubr.f32.mxu0 0.0
  %1034 = vmatmul.mubr.f32.gmra.mrb[0].mxu0 %v718
  %v1035 = vpop.f32.mrb[0].mxu0
  %v1036 = vadd.f32 %v762, %v1035
  %v1037 = vpop.f32.mrb[0].mxu0
  %1038 = vmatprep.mubr.f32.mxu0 0.0
  %1039 = vmatmul.mubr.f32.gmra.mrb[0].mxu0 %v719
  %v1040 = vpop.f32.mrb[0].mxu0
  %v1041 = vadd.f32 %v762, %v1040
  %v1042 = vpop.f32.mrb[0].mxu0
  %1043 = vmatprep.mubr.f32.mxu0 0.0
  %1044 = vmatmul.mubr.f32.gmra.mrb[0].mxu0 %v720
  %v1045 = vpop.f32.mrb[0].mxu0
  %v1046 = vadd.f32 %v762, %v1045
  %v1047 = vpop.f32.mrb[0].mxu0
  %1048 = vmatprep.mubr.f32.mxu0 0.0
  %1049 = vmatmul.mubr.f32.gmra.mrb[0].mxu0 %v721
  %v1050 = vpop.f32.mrb[0].mxu0
  %v1051 = vadd.f32 %v762, %v1050
  %v1052 = vpop.f32.mrb[0].mxu0
  %1053 = vmatprep.mubr.f32.mxu0 0.0
  %1054 = vmatmul.mubr.f32.gmra.mrb[0].mxu0 %v722
  %v1055 = vpop.f32.mrb[0].mxu0
  %v1056 = vadd.f32 %v762, %v1055
  %v1057 = vpop.f32.mrb[0].mxu0
  %1058 = vmatprep.mubr.f32.mxu0 0.0
  %1059 = vmatmul.mubr.f32.gmra.mrb[0].mxu0 %v723
  %v1060 = vpop.f32.mrb[0].mxu0
  %v1061 = vadd.f32 %v762, %v1060
  %v1062 = vpop.f32.mrb[0].mxu0
  %1063 = vmatprep.mubr.f32.mxu0 0.0
  %1064 = vmatmul.mubr.f32.gmra.mrb[0].mxu0 %v724
  %v1065 = vpop.f32.mrb[0].mxu0
  %v1066 = vadd.f32 %v762, %v1065
  %v1067 = vpop.f32.mrb[0].mxu0
  %1068 = vmatprep.mubr.f32.mxu0 0.0
  %1069 = vmatmul.mubr.f32.gmra.mrb[0].mxu0 %v725
  %v1070 = vpop.f32.mrb[0].mxu0
  %v1071 = vadd.f32 %v762, %v1070
  %v1072 = vpop.f32.mrb[0].mxu0
  %1073 = vmatprep.mubr.f32.mxu0 0.0
  %1074 = vmatmul.mubr.f32.gmra.mrb[0].mxu0 %v726
  %v1075 = vpop.f32.mrb[0].mxu0
  %v1076 = vadd.f32 %v762, %v1075
  %v1077 = vpop.f32.mrb[0].mxu0
  %1078 = vmatprep.mubr.f32.mxu0 0.0
  %1079 = vmatmul.mubr.f32.gmra.mrb[0].mxu0 %v727
  %v1080 = vpop.f32.mrb[0].mxu0
  %v1081 = vadd.f32 %v762, %v1080
  %v1082 = vpop.f32.mrb[0].mxu0
  %1083 = vmatprep.mubr.f32.mxu0 0.0
  %1084 = vmatmul.mubr.f32.gmra.mrb[0].mxu0 %v728
  %v1085 = vpop.f32.mrb[0].mxu0
  %v1086 = vadd.f32 %v762, %v1085
  %v1087 = vpop.f32.mrb[0].mxu0
  %1088 = vmatprep.mubr.f32.mxu0 0.0
  %1089 = vmatmul.mubr.f32.gmra.mrb[0].mxu0 %v729
  %v1090 = vpop.f32.mrb[0].mxu0
  %v1091 = vadd.f32 %v762, %v1090
  %v1092 = vpop.f32.mrb[0].mxu0
  %1093 = vmatprep.mubr.f32.mxu0 0.0
  %1094 = vmatmul.mubr.f32.gmra.mrb[0].mxu0 %v730
  %v1095 = vpop.f32.mrb[0].mxu0
  %v1096 = vadd.f32 %v762, %v1095
  %v1097 = vpop.f32.mrb[0].mxu0
  %1098 = vmatprep.mubr.f32.mxu0 0.0
  %1099 = vmatmul.mubr.f32.gmra.mrb[0].mxu0 %v731
  %v1100 = vpop.f32.mrb[0].mxu0
  %v1101 = vadd.f32 %v762, %v1100
  %v1102 = vpop.f32.mrb[0].mxu0
  %1103 = vmatprep.mubr.f32.mxu0 0.0
  %1104 = vmatmul.mubr.f32.gmra.mrb[0].mxu0 %v732
  %v1105 = vpop.f32.mrb[0].mxu0
  %v1106 = vadd.f32 %v762, %v1105
  %v1107 = vpop.f32.mrb[0].mxu0
  %1108 = vmatprep.mubr.f32.mxu0 0.0
  %1109 = vmatmul.mubr.f32.gmra.mrb[0].mxu0 %v733
  %v1110 = vpop.f32.mrb[0].mxu0
  %v1111 = vadd.f32 %v762, %v1110
  %v1112 = vpop.f32.mrb[0].mxu0
  %1113 = vmatprep.mubr.f32.mxu0 0.0
  %1114 = vmatmul.mubr.f32.gmra.mrb[0].mxu0 %v734
  %v1115 = vpop.f32.mrb[0].mxu0
  %v1116 = vadd.f32 %v762, %v1115
  %v1117 = vpop.f32.mrb[0].mxu0
  %1118 = vmatprep.mubr.f32.mxu0 0.0
  %1119 = vmatmul.mubr.f32.gmra.mrb[0].mxu0 %v735
  %v1120 = vpop.f32.mrb[0].mxu0
  %v1121 = vadd.f32 %v762, %v1120
  %v1122 = vpop.f32.mrb[0].mxu0
  %1123 = vmatprep.mubr.f32.mxu0 0.0
  %1124 = vmatmul.mubr.f32.gmra.mrb[0].mxu0 %v736
  %v1125 = vpop.f32.mrb[0].mxu0
  %v1126 = vadd.f32 %v762, %v1125
  %v1127 = vpop.f32.mrb[0].mxu0
  %1128 = vmatprep.mubr.f32.mxu0 0.0
  %1129 = vmatmul.mubr.f32.gmra.mrb[0].mxu0 %v737
  %v1130 = vpop.f32.mrb[0].mxu0
  %v1131 = vadd.f32 %v762, %v1130
  %v1132 = vpop.f32.mrb[0].mxu0
  %1133 = vmatprep.mubr.f32.mxu0 0.0
  %1134 = vmatmul.mubr.f32.gmra.mrb[0].mxu0 %v738
  %v1135 = vpop.f32.mrb[0].mxu0
  %v1136 = vadd.f32 %v762, %v1135
  %v1137 = vpop.f32.mrb[0].mxu0
  %1138 = vmatprep.mubr.f32.mxu0 0.0
  %1139 = vmatmul.mubr.f32.gmra.mrb[0].mxu0 %v739
  %v1140 = vpop.f32.mrb[0].mxu0
  %v1141 = vadd.f32 %v762, %v1140
  %v1142 = vpop.f32.mrb[0].mxu0
  %1143 = vmatprep.mubr.f32.mxu0 0.0
  %1144 = vmatmul.mubr.f32.gmra.mrb[0].mxu0 %v740
  %v1145 = vpop.f32.mrb[0].mxu0
  %v1146 = vadd.f32 %v762, %v1145
  %v1147 = vpop.f32.mrb[0].mxu0
  %1148 = vdwg.mxu0
  %v1149 = vmax.f32 %v831, 0.0
  %v1150 = vmax.f32 %v836, 0.0
  %v1151 = vmax.f32 %v841, 0.0
  %v1152 = vmax.f32 %v846, 0.0
  %v1153 = vmax.f32 %v851, 0.0
  %v1154 = vmax.f32 %v856, 0.0
  %v1155 = vmax.f32 %v861, 0.0
  %v1156 = vmax.f32 %v866, 0.0
  %v1157 = vmax.f32 %v871, 0.0
  %v1158 = vmax.f32 %v876, 0.0
  %v1159 = vmax.f32 %v881, 0.0
  %v1160 = vmax.f32 %v886, 0.0
  %v1161 = vmax.f32 %v891, 0.0
  %v1162 = vmax.f32 %v896, 0.0
  %v1163 = vmax.f32 %v901, 0.0
  %v1164 = vmax.f32 %v906, 0.0
  %v1165 = vmax.f32 %v911, 0.0
  %v1166 = vmax.f32 %v916, 0.0
  %v1167 = vmax.f32 %v921, 0.0
  %v1168 = vmax.f32 %v926, 0.0
  %v1169 = vmax.f32 %v931, 0.0
  %v1170 = vmax.f32 %v936, 0.0
  %v1171 = vmax.f32 %v941, 0.0
  %v1172 = vmax.f32 %v946, 0.0
  %v1173 = vmax.f32 %v951, 0.0
  %v1174 = vmax.f32 %v956, 0.0
  %v1175 = vmax.f32 %v961, 0.0
  %v1176 = vmax.f32 %v966, 0.0
  %v1177 = vmax.f32 %v971, 0.0
  %v1178 = vmax.f32 %v976, 0.0
  %v1179 = vmax.f32 %v981, 0.0
  %v1180 = vmax.f32 %v986, 0.0
  %v1181 = vmax.f32 %v991, 0.0
  %v1182 = vmax.f32 %v996, 0.0
  %v1183 = vmax.f32 %v1001, 0.0
  %v1184 = vmax.f32 %v1006, 0.0
  %v1185 = vmax.f32 %v1011, 0.0
  %v1186 = vmax.f32 %v1016, 0.0
  %v1187 = vmax.f32 %v1021, 0.0
  %v1188 = vmax.f32 %v1026, 0.0
  %v1189 = vmax.f32 %v1031, 0.0
  %v1190 = vmax.f32 %v1036, 0.0
  %v1191 = vmax.f32 %v1041, 0.0
  %v1192 = vmax.f32 %v1046, 0.0
  %v1193 = vmax.f32 %v1051, 0.0
  %v1194 = vmax.f32 %v1056, 0.0
  %v1195 = vmax.f32 %v1061, 0.0
  %v1196 = vmax.f32 %v1066, 0.0
  %v1197 = vmax.f32 %v1071, 0.0
  %v1198 = vmax.f32 %v1076, 0.0
  %v1199 = vmax.f32 %v1081, 0.0
  %v1200 = vmax.f32 %v1086, 0.0
  %v1201 = vmax.f32 %v1091, 0.0
  %v1202 = vmax.f32 %v1096, 0.0
  %v1203 = vmax.f32 %v1101, 0.0
  %v1204 = vmax.f32 %v1106, 0.0
  %v1205 = vmax.f32 %v1111, 0.0
  %v1206 = vmax.f32 %v1116, 0.0
  %v1207 = vmax.f32 %v1121, 0.0
  %v1208 = vmax.f32 %v1126, 0.0
  %v1209 = vmax.f32 %v1131, 0.0
  %v1210 = vmax.f32 %v1136, 0.0
  %v1211 = vmax.f32 %v1141, 0.0
  %v1212 = vmax.f32 %v1146, 0.0
  %v1213 = vld [vmem:[%s5] sm:$0xff]
  %v1214 = vld [vmem:[%s5 + $0x8] sm:$0xff]
  %v1215 = vld [vmem:[%s5 + $0x10] sm:$0xff]
  %v1216 = vld [vmem:[%s5 + $0x18] sm:$0xff]
  %v1217 = vld [vmem:[%s5 + $0x20] sm:$0xff]
  %v1218 = vld [vmem:[%s5 + $0x28] sm:$0xff]
  %v1219 = vld [vmem:[%s5 + $0x30] sm:$0xff]
  %v1220 = vld [vmem:[%s5 + $0x38] sm:$0xff]
  %v1221 = vld [vmem:[%s5 + $0x40] sm:$0xff]
  %v1222 = vld [vmem:[%s5 + $0x48] sm:$0xff]
  %v1223 = vld [vmem:[%s5 + $0x50] sm:$0xff]
  %v1224 = vld [vmem:[%s5 + $0x58] sm:$0xff]
  %v1225 = vld [vmem:[%s5 + $0x60] sm:$0xff]
  %v1226 = vld [vmem:[%s5 + $0x68] sm:$0xff]
  %v1227 = vld [vmem:[%s5 + $0x70] sm:$0xff]
  %v1228 = vld [vmem:[%s5 + $0x78] sm:$0xff]
  %v1229 = vld [vmem:[%s6] sm:$0x1]
  %v1231 = vlaneseq
  %v1232 = vshrl.u32 %v1231, 7
  %v1233 = vsub.s32 0, %v1232
  %v1234 = vrot.slane %v1229, %v1233
  %1236 = vmatprep.subr.mxu0 0.0
  %1237 = vmatpush1.msra.mxu0 %v1213
  %1238 = vmatprep.subr.mxu0 0.0
  %1239 = vmatpush1.msra.mxu0 %v1214
  %1240 = vmatprep.subr.mxu0 0.0
  %1241 = vmatpush1.msra.mxu0 %v1215
  %1242 = vmatprep.subr.mxu0 0.0
  %1243 = vmatpush1.msra.mxu0 %v1216
  %1244 = vmatprep.subr.mxu0 0.0
  %1245 = vmatpush1.msra.mxu0 %v1217
  %1246 = vmatprep.subr.mxu0 0.0
  %1247 = vmatpush1.msra.mxu0 %v1218
  %1248 = vmatprep.subr.mxu0 0.0
  %1249 = vmatpush1.msra.mxu0 %v1219
  %1250 = vmatprep.subr.mxu0 0.0
  %1251 = vmatpush1.msra.mxu0 %v1220
  %1252 = vmatprep.subr.mxu0 0.0
  %1253 = vmatpush1.msra.mxu0 %v1221
  %1254 = vmatprep.subr.mxu0 0.0
  %1255 = vmatpush1.msra.mxu0 %v1222
  %1256 = vmatprep.subr.mxu0 0.0
  %1257 = vmatpush1.msra.mxu0 %v1223
  %1258 = vmatprep.subr.mxu0 0.0
  %1259 = vmatpush1.msra.mxu0 %v1224
  %1260 = vmatprep.subr.mxu0 0.0
  %1261 = vmatpush1.msra.mxu0 %v1225
  %1262 = vmatprep.subr.mxu0 0.0
  %1263 = vmatpush1.msra.mxu0 %v1226
  %1264 = vmatprep.subr.mxu0 0.0
  %1265 = vmatpush1.msra.mxu0 %v1227
  %1266 = vmatprep.subr.mxu0 0.0
  %1267 = vmatpush1.msra.mxu0 %v1228
  %1268 = vmatprep.subr.mxu0 0.0
  %1269 = vmatpush1.msra.mxu0 0.0
  %1270 = vmatprep.subr.mxu0 0.0
  %1271 = vmatpush1.msra.mxu0 0.0
  %1272 = vmatprep.subr.mxu0 0.0
  %1273 = vmatpush1.msra.mxu0 0.0
  %1274 = vmatprep.subr.mxu0 0.0
  %1275 = vmatpush1.msra.mxu0 0.0
  %1276 = vmatprep.subr.mxu0 0.0
  %1277 = vmatpush1.msra.mxu0 0.0
  %1278 = vmatprep.subr.mxu0 0.0
  %1279 = vmatpush1.msra.mxu0 0.0
  %1280 = vmatprep.subr.mxu0 0.0
  %1281 = vmatpush1.msra.mxu0 0.0
  %1282 = vmatprep.subr.mxu0 0.0
  %1283 = vmatpush1.msra.mxu0 0.0
  %1284 = vmatprep.subr.mxu0 0.0
  %1285 = vmatpush1.msra.mxu0 0.0
  %1286 = vmatprep.subr.mxu0 0.0
  %1287 = vmatpush1.msra.mxu0 0.0
  %1288 = vmatprep.subr.mxu0 0.0
  %1289 = vmatpush1.msra.mxu0 0.0
  %1290 = vmatprep.subr.mxu0 0.0
  %1291 = vmatpush1.msra.mxu0 0.0
  %1292 = vmatprep.subr.mxu0 0.0
  %1293 = vmatpush1.msra.mxu0 0.0
  %1294 = vmatprep.subr.mxu0 0.0
  %1295 = vmatpush1.msra.mxu0 0.0
  %1296 = vmatprep.subr.mxu0 0.0
  %1297 = vmatpush1.msra.mxu0 0.0
  %1298 = vmatprep.subr.mxu0 0.0
  %1299 = vmatpush1.msra.mxu0 0.0
  %1300 = vmatprep.mubr.f32.mxu0 0.0
  %1301 = vmatmul.mubr.f32.gmra.mrb[0].mxu0 %v1149
  %v1302 = vpop.f32.mrb[0].mxu0
  %v1303 = vadd.f32 %v1234, %v1302
  %v1304 = vpop.f32.mrb[0].mxu0
  %1305 = vmatprep.mubr.f32.mxu0 0.0
  %1306 = vmatmul.mubr.f32.gmra.mrb[0].mxu0 %v1150
  %v1307 = vpop.f32.mrb[0].mxu0
  %v1308 = vadd.f32 %v1234, %v1307
  %v1309 = vpop.f32.mrb[0].mxu0
  %1310 = vmatprep.mubr.f32.mxu0 0.0
  %1311 = vmatmul.mubr.f32.gmra.mrb[0].mxu0 %v1151
  %v1312 = vpop.f32.mrb[0].mxu0
  %v1313 = vadd.f32 %v1234, %v1312
  %v1314 = vpop.f32.mrb[0].mxu0
  %1315 = vmatprep.mubr.f32.mxu0 0.0
  %1316 = vmatmul.mubr.f32.gmra.mrb[0].mxu0 %v1152
  %v1317 = vpop.f32.mrb[0].mxu0
  %v1318 = vadd.f32 %v1234, %v1317
  %v1319 = vpop.f32.mrb[0].mxu0
  %1320 = vmatprep.mubr.f32.mxu0 0.0
  %1321 = vmatmul.mubr.f32.gmra.mrb[0].mxu0 %v1153
  %v1322 = vpop.f32.mrb[0].mxu0
  %v1323 = vadd.f32 %v1234, %v1322
  %v1324 = vpop.f32.mrb[0].mxu0
  %1325 = vmatprep.mubr.f32.mxu0 0.0
  %1326 = vmatmul.mubr.f32.gmra.mrb[0].mxu0 %v1154
  %v1327 = vpop.f32.mrb[0].mxu0
  %v1328 = vadd.f32 %v1234, %v1327
  %v1329 = vpop.f32.mrb[0].mxu0
  %1330 = vmatprep.mubr.f32.mxu0 0.0
  %1331 = vmatmul.mubr.f32.gmra.mrb[0].mxu0 %v1155
  %v1332 = vpop.f32.mrb[0].mxu0
  %v1333 = vadd.f32 %v1234, %v1332
  %v1334 = vpop.f32.mrb[0].mxu0
  %1335 = vmatprep.mubr.f32.mxu0 0.0
  %1336 = vmatmul.mubr.f32.gmra.mrb[0].mxu0 %v1156
  %v1337 = vpop.f32.mrb[0].mxu0
  %v1338 = vadd.f32 %v1234, %v1337
  %v1339 = vpop.f32.mrb[0].mxu0
  %1340 = vmatprep.mubr.f32.mxu0 0.0
  %1341 = vmatmul.mubr.f32.gmra.mrb[0].mxu0 %v1157
  %v1342 = vpop.f32.mrb[0].mxu0
  %v1343 = vadd.f32 %v1234, %v1342
  %v1344 = vpop.f32.mrb[0].mxu0
  %1345 = vmatprep.mubr.f32.mxu0 0.0
  %1346 = vmatmul.mubr.f32.gmra.mrb[0].mxu0 %v1158
  %v1347 = vpop.f32.mrb[0].mxu0
  %v1348 = vadd.f32 %v1234, %v1347
  %v1349 = vpop.f32.mrb[0].mxu0
  %1350 = vmatprep.mubr.f32.mxu0 0.0
  %1351 = vmatmul.mubr.f32.gmra.mrb[0].mxu0 %v1159
  %v1352 = vpop.f32.mrb[0].mxu0
  %v1353 = vadd.f32 %v1234, %v1352
  %v1354 = vpop.f32.mrb[0].mxu0
  %1355 = vmatprep.mubr.f32.mxu0 0.0
  %1356 = vmatmul.mubr.f32.gmra.mrb[0].mxu0 %v1160
  %v1357 = vpop.f32.mrb[0].mxu0
  %v1358 = vadd.f32 %v1234, %v1357
  %v1359 = vpop.f32.mrb[0].mxu0
  %1360 = vmatprep.mubr.f32.mxu0 0.0
  %1361 = vmatmul.mubr.f32.gmra.mrb[0].mxu0 %v1161
  %v1362 = vpop.f32.mrb[0].mxu0
  %v1363 = vadd.f32 %v1234, %v1362
  %v1364 = vpop.f32.mrb[0].mxu0
  %1365 = vmatprep.mubr.f32.mxu0 0.0
  %1366 = vmatmul.mubr.f32.gmra.mrb[0].mxu0 %v1162
  %v1367 = vpop.f32.mrb[0].mxu0
  %v1368 = vadd.f32 %v1234, %v1367
  %v1369 = vpop.f32.mrb[0].mxu0
  %1370 = vmatprep.mubr.f32.mxu0 0.0
  %1371 = vmatmul.mubr.f32.gmra.mrb[0].mxu0 %v1163
  %v1372 = vpop.f32.mrb[0].mxu0
  %v1373 = vadd.f32 %v1234, %v1372
  %v1374 = vpop.f32.mrb[0].mxu0
  %1375 = vmatprep.mubr.f32.mxu0 0.0
  %1376 = vmatmul.mubr.f32.gmra.mrb[0].mxu0 %v1164
  %v1377 = vpop.f32.mrb[0].mxu0
  %v1378 = vadd.f32 %v1234, %v1377
  %v1379 = vpop.f32.mrb[0].mxu0
  %1380 = vmatprep.mubr.f32.mxu0 0.0
  %1381 = vmatmul.mubr.f32.gmra.mrb[0].mxu0 %v1165
  %v1382 = vpop.f32.mrb[0].mxu0
  %v1383 = vadd.f32 %v1234, %v1382
  %v1384 = vpop.f32.mrb[0].mxu0
  %1385 = vmatprep.mubr.f32.mxu0 0.0
  %1386 = vmatmul.mubr.f32.gmra.mrb[0].mxu0 %v1166
  %v1387 = vpop.f32.mrb[0].mxu0
  %v1388 = vadd.f32 %v1234, %v1387
  %v1389 = vpop.f32.mrb[0].mxu0
  %1390 = vmatprep.mubr.f32.mxu0 0.0
  %1391 = vmatmul.mubr.f32.gmra.mrb[0].mxu0 %v1167
  %v1392 = vpop.f32.mrb[0].mxu0
  %v1393 = vadd.f32 %v1234, %v1392
  %v1394 = vpop.f32.mrb[0].mxu0
  %1395 = vmatprep.mubr.f32.mxu0 0.0
  %1396 = vmatmul.mubr.f32.gmra.mrb[0].mxu0 %v1168
  %v1397 = vpop.f32.mrb[0].mxu0
  %v1398 = vadd.f32 %v1234, %v1397
  %v1399 = vpop.f32.mrb[0].mxu0
  %1400 = vmatprep.mubr.f32.mxu0 0.0
  %1401 = vmatmul.mubr.f32.gmra.mrb[0].mxu0 %v1169
  %v1402 = vpop.f32.mrb[0].mxu0
  %v1403 = vadd.f32 %v1234, %v1402
  %v1404 = vpop.f32.mrb[0].mxu0
  %1405 = vmatprep.mubr.f32.mxu0 0.0
  %1406 = vmatmul.mubr.f32.gmra.mrb[0].mxu0 %v1170
  %v1407 = vpop.f32.mrb[0].mxu0
  %v1408 = vadd.f32 %v1234, %v1407
  %v1409 = vpop.f32.mrb[0].mxu0
  %1410 = vmatprep.mubr.f32.mxu0 0.0
  %1411 = vmatmul.mubr.f32.gmra.mrb[0].mxu0 %v1171
  %v1412 = vpop.f32.mrb[0].mxu0
  %v1413 = vadd.f32 %v1234, %v1412
  %v1414 = vpop.f32.mrb[0].mxu0
  %1415 = vmatprep.mubr.f32.mxu0 0.0
  %1416 = vmatmul.mubr.f32.gmra.mrb[0].mxu0 %v1172
  %v1417 = vpop.f32.mrb[0].mxu0
  %v1418 = vadd.f32 %v1234, %v1417
  %v1419 = vpop.f32.mrb[0].mxu0
  %1420 = vmatprep.mubr.f32.mxu0 0.0
  %1421 = vmatmul.mubr.f32.gmra.mrb[0].mxu0 %v1173
  %v1422 = vpop.f32.mrb[0].mxu0
  %v1423 = vadd.f32 %v1234, %v1422
  %v1424 = vpop.f32.mrb[0].mxu0
  %1425 = vmatprep.mubr.f32.mxu0 0.0
  %1426 = vmatmul.mubr.f32.gmra.mrb[0].mxu0 %v1174
  %v1427 = vpop.f32.mrb[0].mxu0
  %v1428 = vadd.f32 %v1234, %v1427
  %v1429 = vpop.f32.mrb[0].mxu0
  %1430 = vmatprep.mubr.f32.mxu0 0.0
  %1431 = vmatmul.mubr.f32.gmra.mrb[0].mxu0 %v1175
  %v1432 = vpop.f32.mrb[0].mxu0
  %v1433 = vadd.f32 %v1234, %v1432
  %v1434 = vpop.f32.mrb[0].mxu0
  %1435 = vmatprep.mubr.f32.mxu0 0.0
  %1436 = vmatmul.mubr.f32.gmra.mrb[0].mxu0 %v1176
  %v1437 = vpop.f32.mrb[0].mxu0
  %v1438 = vadd.f32 %v1234, %v1437
  %v1439 = vpop.f32.mrb[0].mxu0
  %1440 = vmatprep.mubr.f32.mxu0 0.0
  %1441 = vmatmul.mubr.f32.gmra.mrb[0].mxu0 %v1177
  %v1442 = vpop.f32.mrb[0].mxu0
  %v1443 = vadd.f32 %v1234, %v1442
  %v1444 = vpop.f32.mrb[0].mxu0
  %1445 = vmatprep.mubr.f32.mxu0 0.0
  %1446 = vmatmul.mubr.f32.gmra.mrb[0].mxu0 %v1178
  %v1447 = vpop.f32.mrb[0].mxu0
  %v1448 = vadd.f32 %v1234, %v1447
  %v1449 = vpop.f32.mrb[0].mxu0
  %1450 = vmatprep.mubr.f32.mxu0 0.0
  %1451 = vmatmul.mubr.f32.gmra.mrb[0].mxu0 %v1179
  %v1452 = vpop.f32.mrb[0].mxu0
  %v1453 = vadd.f32 %v1234, %v1452
  %v1454 = vpop.f32.mrb[0].mxu0
  %1455 = vmatprep.mubr.f32.mxu0 0.0
  %1456 = vmatmul.mubr.f32.gmra.mrb[0].mxu0 %v1180
  %v1457 = vpop.f32.mrb[0].mxu0
  %v1458 = vadd.f32 %v1234, %v1457
  %v1459 = vpop.f32.mrb[0].mxu0
  %1460 = vmatprep.mubr.f32.mxu0 0.0
  %1461 = vmatmul.mubr.f32.gmra.mrb[0].mxu0 %v1181
  %v1462 = vpop.f32.mrb[0].mxu0
  %v1463 = vadd.f32 %v1234, %v1462
  %v1464 = vpop.f32.mrb[0].mxu0
  %1465 = vmatprep.mubr.f32.mxu0 0.0
  %1466 = vmatmul.mubr.f32.gmra.mrb[0].mxu0 %v1182
  %v1467 = vpop.f32.mrb[0].mxu0
  %v1468 = vadd.f32 %v1234, %v1467
  %v1469 = vpop.f32.mrb[0].mxu0
  %1470 = vmatprep.mubr.f32.mxu0 0.0
  %1471 = vmatmul.mubr.f32.gmra.mrb[0].mxu0 %v1183
  %v1472 = vpop.f32.mrb[0].mxu0
  %v1473 = vadd.f32 %v1234, %v1472
  %v1474 = vpop.f32.mrb[0].mxu0
  %1475 = vmatprep.mubr.f32.mxu0 0.0
  %1476 = vmatmul.mubr.f32.gmra.mrb[0].mxu0 %v1184
  %v1477 = vpop.f32.mrb[0].mxu0
  %v1478 = vadd.f32 %v1234, %v1477
  %v1479 = vpop.f32.mrb[0].mxu0
  %1480 = vmatprep.mubr.f32.mxu0 0.0
  %1481 = vmatmul.mubr.f32.gmra.mrb[0].mxu0 %v1185
  %v1482 = vpop.f32.mrb[0].mxu0
  %v1483 = vadd.f32 %v1234, %v1482
  %v1484 = vpop.f32.mrb[0].mxu0
  %1485 = vmatprep.mubr.f32.mxu0 0.0
  %1486 = vmatmul.mubr.f32.gmra.mrb[0].mxu0 %v1186
  %v1487 = vpop.f32.mrb[0].mxu0
  %v1488 = vadd.f32 %v1234, %v1487
  %v1489 = vpop.f32.mrb[0].mxu0
  %1490 = vmatprep.mubr.f32.mxu0 0.0
  %1491 = vmatmul.mubr.f32.gmra.mrb[0].mxu0 %v1187
  %v1492 = vpop.f32.mrb[0].mxu0
  %v1493 = vadd.f32 %v1234, %v1492
  %v1494 = vpop.f32.mrb[0].mxu0
  %1495 = vmatprep.mubr.f32.mxu0 0.0
  %1496 = vmatmul.mubr.f32.gmra.mrb[0].mxu0 %v1188
  %v1497 = vpop.f32.mrb[0].mxu0
  %v1498 = vadd.f32 %v1234, %v1497
  %v1499 = vpop.f32.mrb[0].mxu0
  %1500 = vmatprep.mubr.f32.mxu0 0.0
  %1501 = vmatmul.mubr.f32.gmra.mrb[0].mxu0 %v1189
  %v1502 = vpop.f32.mrb[0].mxu0
  %v1503 = vadd.f32 %v1234, %v1502
  %v1504 = vpop.f32.mrb[0].mxu0
  %1505 = vmatprep.mubr.f32.mxu0 0.0
  %1506 = vmatmul.mubr.f32.gmra.mrb[0].mxu0 %v1190
  %v1507 = vpop.f32.mrb[0].mxu0
  %v1508 = vadd.f32 %v1234, %v1507
  %v1509 = vpop.f32.mrb[0].mxu0
  %1510 = vmatprep.mubr.f32.mxu0 0.0
  %1511 = vmatmul.mubr.f32.gmra.mrb[0].mxu0 %v1191
  %v1512 = vpop.f32.mrb[0].mxu0
  %v1513 = vadd.f32 %v1234, %v1512
  %v1514 = vpop.f32.mrb[0].mxu0
  %1515 = vmatprep.mubr.f32.mxu0 0.0
  %1516 = vmatmul.mubr.f32.gmra.mrb[0].mxu0 %v1192
  %v1517 = vpop.f32.mrb[0].mxu0
  %v1518 = vadd.f32 %v1234, %v1517
  %v1519 = vpop.f32.mrb[0].mxu0
  %1520 = vmatprep.mubr.f32.mxu0 0.0
  %1521 = vmatmul.mubr.f32.gmra.mrb[0].mxu0 %v1193
  %v1522 = vpop.f32.mrb[0].mxu0
  %v1523 = vadd.f32 %v1234, %v1522
  %v1524 = vpop.f32.mrb[0].mxu0
  %1525 = vmatprep.mubr.f32.mxu0 0.0
  %1526 = vmatmul.mubr.f32.gmra.mrb[0].mxu0 %v1194
  %v1527 = vpop.f32.mrb[0].mxu0
  %v1528 = vadd.f32 %v1234, %v1527
  %v1529 = vpop.f32.mrb[0].mxu0
  %1530 = vmatprep.mubr.f32.mxu0 0.0
  %1531 = vmatmul.mubr.f32.gmra.mrb[0].mxu0 %v1195
  %v1532 = vpop.f32.mrb[0].mxu0
  %v1533 = vadd.f32 %v1234, %v1532
  %v1534 = vpop.f32.mrb[0].mxu0
  %1535 = vmatprep.mubr.f32.mxu0 0.0
  %1536 = vmatmul.mubr.f32.gmra.mrb[0].mxu0 %v1196
  %v1537 = vpop.f32.mrb[0].mxu0
  %v1538 = vadd.f32 %v1234, %v1537
  %v1539 = vpop.f32.mrb[0].mxu0
  %1540 = vmatprep.mubr.f32.mxu0 0.0
  %1541 = vmatmul.mubr.f32.gmra.mrb[0].mxu0 %v1197
  %v1542 = vpop.f32.mrb[0].mxu0
  %v1543 = vadd.f32 %v1234, %v1542
  %v1544 = vpop.f32.mrb[0].mxu0
  %1545 = vmatprep.mubr.f32.mxu0 0.0
  %1546 = vmatmul.mubr.f32.gmra.mrb[0].mxu0 %v1198
  %v1547 = vpop.f32.mrb[0].mxu0
  %v1548 = vadd.f32 %v1234, %v1547
  %v1549 = vpop.f32.mrb[0].mxu0
  %1550 = vmatprep.mubr.f32.mxu0 0.0
  %1551 = vmatmul.mubr.f32.gmra.mrb[0].mxu0 %v1199
  %v1552 = vpop.f32.mrb[0].mxu0
  %v1553 = vadd.f32 %v1234, %v1552
  %v1554 = vpop.f32.mrb[0].mxu0
  %1555 = vmatprep.mubr.f32.mxu0 0.0
  %1556 = vmatmul.mubr.f32.gmra.mrb[0].mxu0 %v1200
  %v1557 = vpop.f32.mrb[0].mxu0
  %v1558 = vadd.f32 %v1234, %v1557
  %v1559 = vpop.f32.mrb[0].mxu0
  %1560 = vmatprep.mubr.f32.mxu0 0.0
  %1561 = vmatmul.mubr.f32.gmra.mrb[0].mxu0 %v1201
  %v1562 = vpop.f32.mrb[0].mxu0
  %v1563 = vadd.f32 %v1234, %v1562
  %v1564 = vpop.f32.mrb[0].mxu0
  %1565 = vmatprep.mubr.f32.mxu0 0.0
  %1566 = vmatmul.mubr.f32.gmra.mrb[0].mxu0 %v1202
  %v1567 = vpop.f32.mrb[0].mxu0
  %v1568 = vadd.f32 %v1234, %v1567
  %v1569 = vpop.f32.mrb[0].mxu0
  %1570 = vmatprep.mubr.f32.mxu0 0.0
  %1571 = vmatmul.mubr.f32.gmra.mrb[0].mxu0 %v1203
  %v1572 = vpop.f32.mrb[0].mxu0
  %v1573 = vadd.f32 %v1234, %v1572
  %v1574 = vpop.f32.mrb[0].mxu0
  %1575 = vmatprep.mubr.f32.mxu0 0.0
  %1576 = vmatmul.mubr.f32.gmra.mrb[0].mxu0 %v1204
  %v1577 = vpop.f32.mrb[0].mxu0
  %v1578 = vadd.f32 %v1234, %v1577
  %v1579 = vpop.f32.mrb[0].mxu0
  %1580 = vmatprep.mubr.f32.mxu0 0.0
  %1581 = vmatmul.mubr.f32.gmra.mrb[0].mxu0 %v1205
  %v1582 = vpop.f32.mrb[0].mxu0
  %v1583 = vadd.f32 %v1234, %v1582
  %v1584 = vpop.f32.mrb[0].mxu0
  %1585 = vmatprep.mubr.f32.mxu0 0.0
  %1586 = vmatmul.mubr.f32.gmra.mrb[0].mxu0 %v1206
  %v1587 = vpop.f32.mrb[0].mxu0
  %v1588 = vadd.f32 %v1234, %v1587
  %v1589 = vpop.f32.mrb[0].mxu0
  %1590 = vmatprep.mubr.f32.mxu0 0.0
  %1591 = vmatmul.mubr.f32.gmra.mrb[0].mxu0 %v1207
  %v1592 = vpop.f32.mrb[0].mxu0
  %v1593 = vadd.f32 %v1234, %v1592
  %v1594 = vpop.f32.mrb[0].mxu0
  %1595 = vmatprep.mubr.f32.mxu0 0.0
  %1596 = vmatmul.mubr.f32.gmra.mrb[0].mxu0 %v1208
  %v1597 = vpop.f32.mrb[0].mxu0
  %v1598 = vadd.f32 %v1234, %v1597
  %v1599 = vpop.f32.mrb[0].mxu0
  %1600 = vmatprep.mubr.f32.mxu0 0.0
  %1601 = vmatmul.mubr.f32.gmra.mrb[0].mxu0 %v1209
  %v1602 = vpop.f32.mrb[0].mxu0
  %v1603 = vadd.f32 %v1234, %v1602
  %v1604 = vpop.f32.mrb[0].mxu0
  %1605 = vmatprep.mubr.f32.mxu0 0.0
  %1606 = vmatmul.mubr.f32.gmra.mrb[0].mxu0 %v1210
  %v1607 = vpop.f32.mrb[0].mxu0
  %v1608 = vadd.f32 %v1234, %v1607
  %v1609 = vpop.f32.mrb[0].mxu0
  %1610 = vmatprep.mubr.f32.mxu0 0.0
  %1611 = vmatmul.mubr.f32.gmra.mrb[0].mxu0 %v1211
  %v1612 = vpop.f32.mrb[0].mxu0
  %v1613 = vadd.f32 %v1234, %v1612
  %v1614 = vpop.f32.mrb[0].mxu0
  %1615 = vmatprep.mubr.f32.mxu0 0.0
  %1616 = vmatmul.mubr.f32.gmra.mrb[0].mxu0 %v1212
  %v1617 = vpop.f32.mrb[0].mxu0
  %v1618 = vadd.f32 %v1234, %v1617
  %v1619 = vpop.f32.mrb[0].mxu0
  %1620 = vdwg.mxu0
  %1621 = vmax.xlane.f32.xlu0 %v1303
  %v1622 = vpop.xlane.xlu0 %1621
  %1623 = vmax.xlane.f32.xlu0 %v1308
  %v1624 = vpop.xlane.xlu0 %1623
  %1625 = vmax.xlane.f32.xlu0 %v1313
  %v1626 = vpop.xlane.xlu0 %1625
  %1627 = vmax.xlane.f32.xlu0 %v1318
  %v1628 = vpop.xlane.xlu0 %1627
  %1629 = vmax.xlane.f32.xlu0 %v1323
  %v1630 = vpop.xlane.xlu0 %1629
  %1631 = vmax.xlane.f32.xlu0 %v1328
  %v1632 = vpop.xlane.xlu0 %1631
  %1633 = vmax.xlane.f32.xlu0 %v1333
  %v1634 = vpop.xlane.xlu0 %1633
  %1635 = vmax.xlane.f32.xlu0 %v1338
  %v1636 = vpop.xlane.xlu0 %1635
  %1637 = vmax.xlane.f32.xlu0 %v1343
  %v1638 = vpop.xlane.xlu0 %1637
  %1639 = vmax.xlane.f32.xlu0 %v1348
  %v1640 = vpop.xlane.xlu0 %1639
  %1641 = vmax.xlane.f32.xlu0 %v1353
  %v1642 = vpop.xlane.xlu0 %1641
  %1643 = vmax.xlane.f32.xlu0 %v1358
  %v1644 = vpop.xlane.xlu0 %1643
  %1645 = vmax.xlane.f32.xlu0 %v1363
  %v1646 = vpop.xlane.xlu0 %1645
  %1647 = vmax.xlane.f32.xlu0 %v1368
  %v1648 = vpop.xlane.xlu0 %1647
  %1649 = vmax.xlane.f32.xlu0 %v1373
  %v1650 = vpop.xlane.xlu0 %1649
  %1651 = vmax.xlane.f32.xlu0 %v1378
  %v1652 = vpop.xlane.xlu0 %1651
  %1653 = vmax.xlane.f32.xlu0 %v1383
  %v1654 = vpop.xlane.xlu0 %1653
  %1655 = vmax.xlane.f32.xlu0 %v1388
  %v1656 = vpop.xlane.xlu0 %1655
  %1657 = vmax.xlane.f32.xlu0 %v1393
  %v1658 = vpop.xlane.xlu0 %1657
  %1659 = vmax.xlane.f32.xlu0 %v1398
  %v1660 = vpop.xlane.xlu0 %1659
  %1661 = vmax.xlane.f32.xlu0 %v1403
  %v1662 = vpop.xlane.xlu0 %1661
  %1663 = vmax.xlane.f32.xlu0 %v1408
  %v1664 = vpop.xlane.xlu0 %1663
  %1665 = vmax.xlane.f32.xlu0 %v1413
  %v1666 = vpop.xlane.xlu0 %1665
  %1667 = vmax.xlane.f32.xlu0 %v1418
  %v1668 = vpop.xlane.xlu0 %1667
  %1669 = vmax.xlane.f32.xlu0 %v1423
  %v1670 = vpop.xlane.xlu0 %1669
  %1671 = vmax.xlane.f32.xlu0 %v1428
  %v1672 = vpop.xlane.xlu0 %1671
  %1673 = vmax.xlane.f32.xlu0 %v1433
  %v1674 = vpop.xlane.xlu0 %1673
  %1675 = vmax.xlane.f32.xlu0 %v1438
  %v1676 = vpop.xlane.xlu0 %1675
  %1677 = vmax.xlane.f32.xlu0 %v1443
  %v1678 = vpop.xlane.xlu0 %1677
  %1679 = vmax.xlane.f32.xlu0 %v1448
  %v1680 = vpop.xlane.xlu0 %1679
  %1681 = vmax.xlane.f32.xlu0 %v1453
  %v1682 = vpop.xlane.xlu0 %1681
  %1683 = vmax.xlane.f32.xlu0 %v1458
  %v1684 = vpop.xlane.xlu0 %1683
  %1685 = vmax.xlane.f32.xlu0 %v1463
  %v1686 = vpop.xlane.xlu0 %1685
  %1687 = vmax.xlane.f32.xlu0 %v1468
  %v1688 = vpop.xlane.xlu0 %1687
  %1689 = vmax.xlane.f32.xlu0 %v1473
  %v1690 = vpop.xlane.xlu0 %1689
  %1691 = vmax.xlane.f32.xlu0 %v1478
  %v1692 = vpop.xlane.xlu0 %1691
  %1693 = vmax.xlane.f32.xlu0 %v1483
  %v1694 = vpop.xlane.xlu0 %1693
  %1695 = vmax.xlane.f32.xlu0 %v1488
  %v1696 = vpop.xlane.xlu0 %1695
  %1697 = vmax.xlane.f32.xlu0 %v1493
  %v1698 = vpop.xlane.xlu0 %1697
  %1699 = vmax.xlane.f32.xlu0 %v1498
  %v1700 = vpop.xlane.xlu0 %1699
  %1701 = vmax.xlane.f32.xlu0 %v1503
  %v1702 = vpop.xlane.xlu0 %1701
  %1703 = vmax.xlane.f32.xlu0 %v1508
  %v1704 = vpop.xlane.xlu0 %1703
  %1705 = vmax.xlane.f32.xlu0 %v1513
  %v1706 = vpop.xlane.xlu0 %1705
  %1707 = vmax.xlane.f32.xlu0 %v1518
  %v1708 = vpop.xlane.xlu0 %1707
  %1709 = vmax.xlane.f32.xlu0 %v1523
  %v1710 = vpop.xlane.xlu0 %1709
  %1711 = vmax.xlane.f32.xlu0 %v1528
  %v1712 = vpop.xlane.xlu0 %1711
  %1713 = vmax.xlane.f32.xlu0 %v1533
  %v1714 = vpop.xlane.xlu0 %1713
  %1715 = vmax.xlane.f32.xlu0 %v1538
  %v1716 = vpop.xlane.xlu0 %1715
  %1717 = vmax.xlane.f32.xlu0 %v1543
  %v1718 = vpop.xlane.xlu0 %1717
  %1719 = vmax.xlane.f32.xlu0 %v1548
  %v1720 = vpop.xlane.xlu0 %1719
  %1721 = vmax.xlane.f32.xlu0 %v1553
  %v1722 = vpop.xlane.xlu0 %1721
  %1723 = vmax.xlane.f32.xlu0 %v1558
  %v1724 = vpop.xlane.xlu0 %1723
  %1725 = vmax.xlane.f32.xlu0 %v1563
  %v1726 = vpop.xlane.xlu0 %1725
  %1727 = vmax.xlane.f32.xlu0 %v1568
  %v1728 = vpop.xlane.xlu0 %1727
  %1729 = vmax.xlane.f32.xlu0 %v1573
  %v1730 = vpop.xlane.xlu0 %1729
  %1731 = vmax.xlane.f32.xlu0 %v1578
  %v1732 = vpop.xlane.xlu0 %1731
  %1733 = vmax.xlane.f32.xlu0 %v1583
  %v1734 = vpop.xlane.xlu0 %1733
  %1735 = vmax.xlane.f32.xlu0 %v1588
  %v1736 = vpop.xlane.xlu0 %1735
  %1737 = vmax.xlane.f32.xlu0 %v1593
  %v1738 = vpop.xlane.xlu0 %1737
  %1739 = vmax.xlane.f32.xlu0 %v1598
  %v1740 = vpop.xlane.xlu0 %1739
  %1741 = vmax.xlane.f32.xlu0 %v1603
  %v1742 = vpop.xlane.xlu0 %1741
  %1743 = vmax.xlane.f32.xlu0 %v1608
  %v1744 = vpop.xlane.xlu0 %1743
  %1745 = vmax.xlane.f32.xlu0 %v1613
  %v1746 = vpop.xlane.xlu0 %1745
  %1747 = vmax.xlane.f32.xlu0 %v1618
  %v1748 = vpop.xlane.xlu0 %1747
  %v1749 = vsub.f32 %v1303, %v1622
  %v1750 = vsub.f32 %v1308, %v1624
  %v1751 = vsub.f32 %v1313, %v1626
  %v1752 = vsub.f32 %v1318, %v1628
  %v1753 = vsub.f32 %v1323, %v1630
  %v1754 = vsub.f32 %v1328, %v1632
  %v1755 = vsub.f32 %v1333, %v1634
  %v1756 = vsub.f32 %v1338, %v1636
  %v1757 = vsub.f32 %v1343, %v1638
  %v1758 = vsub.f32 %v1348, %v1640
  %v1759 = vsub.f32 %v1353, %v1642
  %v1760 = vsub.f32 %v1358, %v1644
  %v1761 = vsub.f32 %v1363, %v1646
  %v1762 = vsub.f32 %v1368, %v1648
  %v1763 = vsub.f32 %v1373, %v1650
  %v1764 = vsub.f32 %v1378, %v1652
  %v1765 = vsub.f32 %v1383, %v1654
  %v1766 = vsub.f32 %v1388, %v1656
  %v1767 = vsub.f32 %v1393, %v1658
  %v1768 = vsub.f32 %v1398, %v1660
  %v1769 = vsub.f32 %v1403, %v1662
  %v1770 = vsub.f32 %v1408, %v1664
  %v1771 = vsub.f32 %v1413, %v1666
  %v1772 = vsub.f32 %v1418, %v1668
  %v1773 = vsub.f32 %v1423, %v1670
  %v1774 = vsub.f32 %v1428, %v1672
  %v1775 = vsub.f32 %v1433, %v1674
  %v1776 = vsub.f32 %v1438, %v1676
  %v1777 = vsub.f32 %v1443, %v1678
  %v1778 = vsub.f32 %v1448, %v1680
  %v1779 = vsub.f32 %v1453, %v1682
  %v1780 = vsub.f32 %v1458, %v1684
  %v1781 = vsub.f32 %v1463, %v1686
  %v1782 = vsub.f32 %v1468, %v1688
  %v1783 = vsub.f32 %v1473, %v1690
  %v1784 = vsub.f32 %v1478, %v1692
  %v1785 = vsub.f32 %v1483, %v1694
  %v1786 = vsub.f32 %v1488, %v1696
  %v1787 = vsub.f32 %v1493, %v1698
  %v1788 = vsub.f32 %v1498, %v1700
  %v1789 = vsub.f32 %v1503, %v1702
  %v1790 = vsub.f32 %v1508, %v1704
  %v1791 = vsub.f32 %v1513, %v1706
  %v1792 = vsub.f32 %v1518, %v1708
  %v1793 = vsub.f32 %v1523, %v1710
  %v1794 = vsub.f32 %v1528, %v1712
  %v1795 = vsub.f32 %v1533, %v1714
  %v1796 = vsub.f32 %v1538, %v1716
  %v1797 = vsub.f32 %v1543, %v1718
  %v1798 = vsub.f32 %v1548, %v1720
  %v1799 = vsub.f32 %v1553, %v1722
  %v1800 = vsub.f32 %v1558, %v1724
  %v1801 = vsub.f32 %v1563, %v1726
  %v1802 = vsub.f32 %v1568, %v1728
  %v1803 = vsub.f32 %v1573, %v1730
  %v1804 = vsub.f32 %v1578, %v1732
  %v1805 = vsub.f32 %v1583, %v1734
  %v1806 = vsub.f32 %v1588, %v1736
  %v1807 = vsub.f32 %v1593, %v1738
  %v1808 = vsub.f32 %v1598, %v1740
  %v1809 = vsub.f32 %v1603, %v1742
  %v1810 = vsub.f32 %v1608, %v1744
  %v1811 = vsub.f32 %v1613, %v1746
  %v1812 = vsub.f32 %v1618, %v1748
  %v1813 = vmul.f32 %v1749, 1.442695
  %v1814 = vpow.pop %v1813
  %v1815 = vmul.f32 %v1750, 1.442695
  %v1816 = vpow.pop %v1815
  %v1817 = vmul.f32 %v1751, 1.442695
  %v1818 = vpow.pop %v1817
  %v1819 = vmul.f32 %v1752, 1.442695
  %v1820 = vpow.pop %v1819
  %v1821 = vmul.f32 %v1753, 1.442695
  %v1822 = vpow.pop %v1821
  %v1823 = vmul.f32 %v1754, 1.442695
  %v1824 = vpow.pop %v1823
  %v1825 = vmul.f32 %v1755, 1.442695
  %v1826 = vpow.pop %v1825
  %v1827 = vmul.f32 %v1756, 1.442695
  %v1828 = vpow.pop %v1827
  %v1829 = vmul.f32 %v1757, 1.442695
  %v1830 = vpow.pop %v1829
  %v1831 = vmul.f32 %v1758, 1.442695
  %v1832 = vpow.pop %v1831
  %v1833 = vmul.f32 %v1759, 1.442695
  %v1834 = vpow.pop %v1833
  %v1835 = vmul.f32 %v1760, 1.442695
  %v1836 = vpow.pop %v1835
  %v1837 = vmul.f32 %v1761, 1.442695
  %v1838 = vpow.pop %v1837
  %v1839 = vmul.f32 %v1762, 1.442695
  %v1840 = vpow.pop %v1839
  %v1841 = vmul.f32 %v1763, 1.442695
  %v1842 = vpow.pop %v1841
  %v1843 = vmul.f32 %v1764, 1.442695
  %v1844 = vpow.pop %v1843
  %v1845 = vmul.f32 %v1765, 1.442695
  %v1846 = vpow.pop %v1845
  %v1847 = vmul.f32 %v1766, 1.442695
  %v1848 = vpow.pop %v1847
  %v1849 = vmul.f32 %v1767, 1.442695
  %v1850 = vpow.pop %v1849
  %v1851 = vmul.f32 %v1768, 1.442695
  %v1852 = vpow.pop %v1851
  %v1853 = vmul.f32 %v1769, 1.442695
  %v1854 = vpow.pop %v1853
  %v1855 = vmul.f32 %v1770, 1.442695
  %v1856 = vpow.pop %v1855
  %v1857 = vmul.f32 %v1771, 1.442695
  %v1858 = vpow.pop %v1857
  %v1859 = vmul.f32 %v1772, 1.442695
  %v1860 = vpow.pop %v1859
  %v1861 = vmul.f32 %v1773, 1.442695
  %v1862 = vpow.pop %v1861
  %v1863 = vmul.f32 %v1774, 1.442695
  %v1864 = vpow.pop %v1863
  %v1865 = vmul.f32 %v1775, 1.442695
  %v1866 = vpow.pop %v1865
  %v1867 = vmul.f32 %v1776, 1.442695
  %v1868 = vpow.pop %v1867
  %v1869 = vmul.f32 %v1777, 1.442695
  %v1870 = vpow.pop %v1869
  %v1871 = vmul.f32 %v1778, 1.442695
  %v1872 = vpow.pop %v1871
  %v1873 = vmul.f32 %v1779, 1.442695
  %v1874 = vpow.pop %v1873
  %v1875 = vmul.f32 %v1780, 1.442695
  %v1876 = vpow.pop %v1875
  %v1877 = vmul.f32 %v1781, 1.442695
  %v1878 = vpow.pop %v1877
  %v1879 = vmul.f32 %v1782, 1.442695
  %v1880 = vpow.pop %v1879
  %v1881 = vmul.f32 %v1783, 1.442695
  %v1882 = vpow.pop %v1881
  %v1883 = vmul.f32 %v1784, 1.442695
  %v1884 = vpow.pop %v1883
  %v1885 = vmul.f32 %v1785, 1.442695
  %v1886 = vpow.pop %v1885
  %v1887 = vmul.f32 %v1786, 1.442695
  %v1888 = vpow.pop %v1887
  %v1889 = vmul.f32 %v1787, 1.442695
  %v1890 = vpow.pop %v1889
  %v1891 = vmul.f32 %v1788, 1.442695
  %v1892 = vpow.pop %v1891
  %v1893 = vmul.f32 %v1789, 1.442695
  %v1894 = vpow.pop %v1893
  %v1895 = vmul.f32 %v1790, 1.442695
  %v1896 = vpow.pop %v1895
  %v1897 = vmul.f32 %v1791, 1.442695
  %v1898 = vpow.pop %v1897
  %v1899 = vmul.f32 %v1792, 1.442695
  %v1900 = vpow.pop %v1899
  %v1901 = vmul.f32 %v1793, 1.442695
  %v1902 = vpow.pop %v1901
  %v1903 = vmul.f32 %v1794, 1.442695
  %v1904 = vpow.pop %v1903
  %v1905 = vmul.f32 %v1795, 1.442695
  %v1906 = vpow.pop %v1905
  %v1907 = vmul.f32 %v1796, 1.442695
  %v1908 = vpow.pop %v1907
  %v1909 = vmul.f32 %v1797, 1.442695
  %v1910 = vpow.pop %v1909
  %v1911 = vmul.f32 %v1798, 1.442695
  %v1912 = vpow.pop %v1911
  %v1913 = vmul.f32 %v1799, 1.442695
  %v1914 = vpow.pop %v1913
  %v1915 = vmul.f32 %v1800, 1.442695
  %v1916 = vpow.pop %v1915
  %v1917 = vmul.f32 %v1801, 1.442695
  %v1918 = vpow.pop %v1917
  %v1919 = vmul.f32 %v1802, 1.442695
  %v1920 = vpow.pop %v1919
  %v1921 = vmul.f32 %v1803, 1.442695
  %v1922 = vpow.pop %v1921
  %v1923 = vmul.f32 %v1804, 1.442695
  %v1924 = vpow.pop %v1923
  %v1925 = vmul.f32 %v1805, 1.442695
  %v1926 = vpow.pop %v1925
  %v1927 = vmul.f32 %v1806, 1.442695
  %v1928 = vpow.pop %v1927
  %v1929 = vmul.f32 %v1807, 1.442695
  %v1930 = vpow.pop %v1929
  %v1931 = vmul.f32 %v1808, 1.442695
  %v1932 = vpow.pop %v1931
  %v1933 = vmul.f32 %v1809, 1.442695
  %v1934 = vpow.pop %v1933
  %v1935 = vmul.f32 %v1810, 1.442695
  %v1936 = vpow.pop %v1935
  %v1937 = vmul.f32 %v1811, 1.442695
  %v1938 = vpow.pop %v1937
  %v1939 = vmul.f32 %v1812, 1.442695
  %v1940 = vpow.pop %v1939
  %1941 = vadd.xlane.f32.xlu0 %v1814
  %v1942 = vpop.xlane.xlu0 %1941
  %1943 = vadd.xlane.f32.xlu0 %v1816
  %v1944 = vpop.xlane.xlu0 %1943
  %1945 = vadd.xlane.f32.xlu0 %v1818
  %v1946 = vpop.xlane.xlu0 %1945
  %1947 = vadd.xlane.f32.xlu0 %v1820
  %v1948 = vpop.xlane.xlu0 %1947
  %1949 = vadd.xlane.f32.xlu0 %v1822
  %v1950 = vpop.xlane.xlu0 %1949
  %1951 = vadd.xlane.f32.xlu0 %v1824
  %v1952 = vpop.xlane.xlu0 %1951
  %1953 = vadd.xlane.f32.xlu0 %v1826
  %v1954 = vpop.xlane.xlu0 %1953
  %1955 = vadd.xlane.f32.xlu0 %v1828
  %v1956 = vpop.xlane.xlu0 %1955
  %1957 = vadd.xlane.f32.xlu0 %v1830
  %v1958 = vpop.xlane.xlu0 %1957
  %1959 = vadd.xlane.f32.xlu0 %v1832
  %v1960 = vpop.xlane.xlu0 %1959
  %1961 = vadd.xlane.f32.xlu0 %v1834
  %v1962 = vpop.xlane.xlu0 %1961
  %1963 = vadd.xlane.f32.xlu0 %v1836
  %v1964 = vpop.xlane.xlu0 %1963
  %1965 = vadd.xlane.f32.xlu0 %v1838
  %v1966 = vpop.xlane.xlu0 %1965
  %1967 = vadd.xlane.f32.xlu0 %v1840
  %v1968 = vpop.xlane.xlu0 %1967
  %1969 = vadd.xlane.f32.xlu0 %v1842
  %v1970 = vpop.xlane.xlu0 %1969
  %1971 = vadd.xlane.f32.xlu0 %v1844
  %v1972 = vpop.xlane.xlu0 %1971
  %1973 = vadd.xlane.f32.xlu0 %v1846
  %v1974 = vpop.xlane.xlu0 %1973
  %1975 = vadd.xlane.f32.xlu0 %v1848
  %v1976 = vpop.xlane.xlu0 %1975
  %1977 = vadd.xlane.f32.xlu0 %v1850
  %v1978 = vpop.xlane.xlu0 %1977
  %1979 = vadd.xlane.f32.xlu0 %v1852
  %v1980 = vpop.xlane.xlu0 %1979
  %1981 = vadd.xlane.f32.xlu0 %v1854
  %v1982 = vpop.xlane.xlu0 %1981
  %1983 = vadd.xlane.f32.xlu0 %v1856
  %v1984 = vpop.xlane.xlu0 %1983
  %1985 = vadd.xlane.f32.xlu0 %v1858
  %v1986 = vpop.xlane.xlu0 %1985
  %1987 = vadd.xlane.f32.xlu0 %v1860
  %v1988 = vpop.xlane.xlu0 %1987
  %1989 = vadd.xlane.f32.xlu0 %v1862
  %v1990 = vpop.xlane.xlu0 %1989
  %1991 = vadd.xlane.f32.xlu0 %v1864
  %v1992 = vpop.xlane.xlu0 %1991
  %1993 = vadd.xlane.f32.xlu0 %v1866
  %v1994 = vpop.xlane.xlu0 %1993
  %1995 = vadd.xlane.f32.xlu0 %v1868
  %v1996 = vpop.xlane.xlu0 %1995
  %1997 = vadd.xlane.f32.xlu0 %v1870
  %v1998 = vpop.xlane.xlu0 %1997
  %1999 = vadd.xlane.f32.xlu0 %v1872
  %v2000 = vpop.xlane.xlu0 %1999
  %2001 = vadd.xlane.f32.xlu0 %v1874
  %v2002 = vpop.xlane.xlu0 %2001
  %2003 = vadd.xlane.f32.xlu0 %v1876
  %v2004 = vpop.xlane.xlu0 %2003
  %2005 = vadd.xlane.f32.xlu0 %v1878
  %v2006 = vpop.xlane.xlu0 %2005
  %2007 = vadd.xlane.f32.xlu0 %v1880
  %v2008 = vpop.xlane.xlu0 %2007
  %2009 = vadd.xlane.f32.xlu0 %v1882
  %v2010 = vpop.xlane.xlu0 %2009
  %2011 = vadd.xlane.f32.xlu0 %v1884
  %v2012 = vpop.xlane.xlu0 %2011
  %2013 = vadd.xlane.f32.xlu0 %v1886
  %v2014 = vpop.xlane.xlu0 %2013
  %2015 = vadd.xlane.f32.xlu0 %v1888
  %v2016 = vpop.xlane.xlu0 %2015
  %2017 = vadd.xlane.f32.xlu0 %v1890
  %v2018 = vpop.xlane.xlu0 %2017
  %2019 = vadd.xlane.f32.xlu0 %v1892
  %v2020 = vpop.xlane.xlu0 %2019
  %2021 = vadd.xlane.f32.xlu0 %v1894
  %v2022 = vpop.xlane.xlu0 %2021
  %2023 = vadd.xlane.f32.xlu0 %v1896
  %v2024 = vpop.xlane.xlu0 %2023
  %2025 = vadd.xlane.f32.xlu0 %v1898
  %v2026 = vpop.xlane.xlu0 %2025
  %2027 = vadd.xlane.f32.xlu0 %v1900
  %v2028 = vpop.xlane.xlu0 %2027
  %2029 = vadd.xlane.f32.xlu0 %v1902
  %v2030 = vpop.xlane.xlu0 %2029
  %2031 = vadd.xlane.f32.xlu0 %v1904
  %v2032 = vpop.xlane.xlu0 %2031
  %2033 = vadd.xlane.f32.xlu0 %v1906
  %v2034 = vpop.xlane.xlu0 %2033
  %2035 = vadd.xlane.f32.xlu0 %v1908
  %v2036 = vpop.xlane.xlu0 %2035
  %2037 = vadd.xlane.f32.xlu0 %v1910
  %v2038 = vpop.xlane.xlu0 %2037
  %2039 = vadd.xlane.f32.xlu0 %v1912
  %v2040 = vpop.xlane.xlu0 %2039
  %2041 = vadd.xlane.f32.xlu0 %v1914
  %v2042 = vpop.xlane.xlu0 %2041
  %2043 = vadd.xlane.f32.xlu0 %v1916
  %v2044 = vpop.xlane.xlu0 %2043
  %2045 = vadd.xlane.f32.xlu0 %v1918
  %v2046 = vpop.xlane.xlu0 %2045
  %2047 = vadd.xlane.f32.xlu0 %v1920
  %v2048 = vpop.xlane.xlu0 %2047
  %2049 = vadd.xlane.f32.xlu0 %v1922
  %v2050 = vpop.xlane.xlu0 %2049
  %2051 = vadd.xlane.f32.xlu0 %v1924
  %v2052 = vpop.xlane.xlu0 %2051
  %2053 = vadd.xlane.f32.xlu0 %v1926
  %v2054 = vpop.xlane.xlu0 %2053
  %2055 = vadd.xlane.f32.xlu0 %v1928
  %v2056 = vpop.xlane.xlu0 %2055
  %2057 = vadd.xlane.f32.xlu0 %v1930
  %v2058 = vpop.xlane.xlu0 %2057
  %2059 = vadd.xlane.f32.xlu0 %v1932
  %v2060 = vpop.xlane.xlu0 %2059
  %2061 = vadd.xlane.f32.xlu0 %v1934
  %v2062 = vpop.xlane.xlu0 %2061
  %2063 = vadd.xlane.f32.xlu0 %v1936
  %v2064 = vpop.xlane.xlu0 %2063
  %2065 = vadd.xlane.f32.xlu0 %v1938
  %v2066 = vpop.xlane.xlu0 %2065
  %2067 = vadd.xlane.f32.xlu0 %v1940
  %v2068 = vpop.xlane.xlu0 %2067
  %v2069 = vrcp.pop %v1942
  %v2070 = vmul.f32 %v1814, %v2069
  %v2071 = vrcp.pop %v1944
  %v2072 = vmul.f32 %v1816, %v2071
  %v2073 = vrcp.pop %v1946
  %v2074 = vmul.f32 %v1818, %v2073
  %v2075 = vrcp.pop %v1948
  %v2076 = vmul.f32 %v1820, %v2075
  %v2077 = vrcp.pop %v1950
  %v2078 = vmul.f32 %v1822, %v2077
  %v2079 = vrcp.pop %v1952
  %v2080 = vmul.f32 %v1824, %v2079
  %v2081 = vrcp.pop %v1954
  %v2082 = vmul.f32 %v1826, %v2081
  %v2083 = vrcp.pop %v1956
  %v2084 = vmul.f32 %v1828, %v2083
  %v2085 = vrcp.pop %v1958
  %v2086 = vmul.f32 %v1830, %v2085
  %v2087 = vrcp.pop %v1960
  %v2088 = vmul.f32 %v1832, %v2087
  %v2089 = vrcp.pop %v1962
  %v2090 = vmul.f32 %v1834, %v2089
  %v2091 = vrcp.pop %v1964
  %v2092 = vmul.f32 %v1836, %v2091
  %v2093 = vrcp.pop %v1966
  %v2094 = vmul.f32 %v1838, %v2093
  %v2095 = vrcp.pop %v1968
  %v2096 = vmul.f32 %v1840, %v2095
  %v2097 = vrcp.pop %v1970
  %v2098 = vmul.f32 %v1842, %v2097
  %v2099 = vrcp.pop %v1972
  %v2100 = vmul.f32 %v1844, %v2099
  %v2101 = vrcp.pop %v1974
  %v2102 = vmul.f32 %v1846, %v2101
  %v2103 = vrcp.pop %v1976
  %v2104 = vmul.f32 %v1848, %v2103
  %v2105 = vrcp.pop %v1978
  %v2106 = vmul.f32 %v1850, %v2105
  %v2107 = vrcp.pop %v1980
  %v2108 = vmul.f32 %v1852, %v2107
  %v2109 = vrcp.pop %v1982
  %v2110 = vmul.f32 %v1854, %v2109
  %v2111 = vrcp.pop %v1984
  %v2112 = vmul.f32 %v1856, %v2111
  %v2113 = vrcp.pop %v1986
  %v2114 = vmul.f32 %v1858, %v2113
  %v2115 = vrcp.pop %v1988
  %v2116 = vmul.f32 %v1860, %v2115
  %v2117 = vrcp.pop %v1990
  %v2118 = vmul.f32 %v1862, %v2117
  %v2119 = vrcp.pop %v1992
  %v2120 = vmul.f32 %v1864, %v2119
  %v2121 = vrcp.pop %v1994
  %v2122 = vmul.f32 %v1866, %v2121
  %v2123 = vrcp.pop %v1996
  %v2124 = vmul.f32 %v1868, %v2123
  %v2125 = vrcp.pop %v1998
  %v2126 = vmul.f32 %v1870, %v2125
  %v2127 = vrcp.pop %v2000
  %v2128 = vmul.f32 %v1872, %v2127
  %v2129 = vrcp.pop %v2002
  %v2130 = vmul.f32 %v1874, %v2129
  %v2131 = vrcp.pop %v2004
  %v2132 = vmul.f32 %v1876, %v2131
  %v2133 = vrcp.pop %v2006
  %v2134 = vmul.f32 %v1878, %v2133
  %v2135 = vrcp.pop %v2008
  %v2136 = vmul.f32 %v1880, %v2135
  %v2137 = vrcp.pop %v2010
  %v2138 = vmul.f32 %v1882, %v2137
  %v2139 = vrcp.pop %v2012
  %v2140 = vmul.f32 %v1884, %v2139
  %v2141 = vrcp.pop %v2014
  %v2142 = vmul.f32 %v1886, %v2141
  %v2143 = vrcp.pop %v2016
  %v2144 = vmul.f32 %v1888, %v2143
  %v2145 = vrcp.pop %v2018
  %v2146 = vmul.f32 %v1890, %v2145
  %v2147 = vrcp.pop %v2020
  %v2148 = vmul.f32 %v1892, %v2147
  %v2149 = vrcp.pop %v2022
  %v2150 = vmul.f32 %v1894, %v2149
  %v2151 = vrcp.pop %v2024
  %v2152 = vmul.f32 %v1896, %v2151
  %v2153 = vrcp.pop %v2026
  %v2154 = vmul.f32 %v1898, %v2153
  %v2155 = vrcp.pop %v2028
  %v2156 = vmul.f32 %v1900, %v2155
  %v2157 = vrcp.pop %v2030
  %v2158 = vmul.f32 %v1902, %v2157
  %v2159 = vrcp.pop %v2032
  %v2160 = vmul.f32 %v1904, %v2159
  %v2161 = vrcp.pop %v2034
  %v2162 = vmul.f32 %v1906, %v2161
  %v2163 = vrcp.pop %v2036
  %v2164 = vmul.f32 %v1908, %v2163
  %v2165 = vrcp.pop %v2038
  %v2166 = vmul.f32 %v1910, %v2165
  %v2167 = vrcp.pop %v2040
  %v2168 = vmul.f32 %v1912, %v2167
  %v2169 = vrcp.pop %v2042
  %v2170 = vmul.f32 %v1914, %v2169
  %v2171 = vrcp.pop %v2044
  %v2172 = vmul.f32 %v1916, %v2171
  %v2173 = vrcp.pop %v2046
  %v2174 = vmul.f32 %v1918, %v2173
  %v2175 = vrcp.pop %v2048
  %v2176 = vmul.f32 %v1920, %v2175
  %v2177 = vrcp.pop %v2050
  %v2178 = vmul.f32 %v1922, %v2177
  %v2179 = vrcp.pop %v2052
  %v2180 = vmul.f32 %v1924, %v2179
  %v2181 = vrcp.pop %v2054
  %v2182 = vmul.f32 %v1926, %v2181
  %v2183 = vrcp.pop %v2056
  %v2184 = vmul.f32 %v1928, %v2183
  %v2185 = vrcp.pop %v2058
  %v2186 = vmul.f32 %v1930, %v2185
  %v2187 = vrcp.pop %v2060
  %v2188 = vmul.f32 %v1932, %v2187
  %v2189 = vrcp.pop %v2062
  %v2190 = vmul.f32 %v1934, %v2189
  %v2191 = vrcp.pop %v2064
  %v2192 = vmul.f32 %v1936, %v2191
  %v2193 = vrcp.pop %v2066
  %v2194 = vmul.f32 %v1938, %v2193
  %v2195 = vrcp.pop %v2068
  %v2196 = vmul.f32 %v1940, %v2195
  %vm2197 = vcmask 64512
  %2198 = vst.msk [vmem:[%s7] sm:$0xff] %vm2197, %v2070
  %2199 = vst.msk [vmem:[%s7 + $0x8] sm:$0xff] %vm2197, %v2072
  %2200 = vst.msk [vmem:[%s7 + $0x10] sm:$0xff] %vm2197, %v2074
  %2201 = vst.msk [vmem:[%s7 + $0x18] sm:$0xff] %vm2197, %v2076
  %2202 = vst.msk [vmem:[%s7 + $0x20] sm:$0xff] %vm2197, %v2078
  %2203 = vst.msk [vmem:[%s7 + $0x28] sm:$0xff] %vm2197, %v2080
  %2204 = vst.msk [vmem:[%s7 + $0x30] sm:$0xff] %vm2197, %v2082
  %2205 = vst.msk [vmem:[%s7 + $0x38] sm:$0xff] %vm2197, %v2084
  %2206 = vst.msk [vmem:[%s7 + $0x40] sm:$0xff] %vm2197, %v2086
  %2207 = vst.msk [vmem:[%s7 + $0x48] sm:$0xff] %vm2197, %v2088
  %2208 = vst.msk [vmem:[%s7 + $0x50] sm:$0xff] %vm2197, %v2090
  %2209 = vst.msk [vmem:[%s7 + $0x58] sm:$0xff] %vm2197, %v2092
  %2210 = vst.msk [vmem:[%s7 + $0x60] sm:$0xff] %vm2197, %v2094
  %2211 = vst.msk [vmem:[%s7 + $0x68] sm:$0xff] %vm2197, %v2096
  %2212 = vst.msk [vmem:[%s7 + $0x70] sm:$0xff] %vm2197, %v2098
  %2213 = vst.msk [vmem:[%s7 + $0x78] sm:$0xff] %vm2197, %v2100
  %2214 = vst.msk [vmem:[%s7 + $0x80] sm:$0xff] %vm2197, %v2102
  %2215 = vst.msk [vmem:[%s7 + $0x88] sm:$0xff] %vm2197, %v2104
  %2216 = vst.msk [vmem:[%s7 + $0x90] sm:$0xff] %vm2197, %v2106
  %2217 = vst.msk [vmem:[%s7 + $0x98] sm:$0xff] %vm2197, %v2108
  %2218 = vst.msk [vmem:[%s7 + $0xa0] sm:$0xff] %vm2197, %v2110
  %2219 = vst.msk [vmem:[%s7 + $0xa8] sm:$0xff] %vm2197, %v2112
  %2220 = vst.msk [vmem:[%s7 + $0xb0] sm:$0xff] %vm2197, %v2114
  %2221 = vst.msk [vmem:[%s7 + $0xb8] sm:$0xff] %vm2197, %v2116
  %2222 = vst.msk [vmem:[%s7 + $0xc0] sm:$0xff] %vm2197, %v2118
  %2223 = vst.msk [vmem:[%s7 + $0xc8] sm:$0xff] %vm2197, %v2120
  %2224 = vst.msk [vmem:[%s7 + $0xd0] sm:$0xff] %vm2197, %v2122
  %2225 = vst.msk [vmem:[%s7 + $0xd8] sm:$0xff] %vm2197, %v2124
  %2226 = vst.msk [vmem:[%s7 + $0xe0] sm:$0xff] %vm2197, %v2126
  %2227 = vst.msk [vmem:[%s7 + $0xe8] sm:$0xff] %vm2197, %v2128
  %2228 = vst.msk [vmem:[%s7 + $0xf0] sm:$0xff] %vm2197, %v2130
  %2229 = vst.msk [vmem:[%s7 + $0xf8] sm:$0xff] %vm2197, %v2132
  %2230 = vst.msk [vmem:[%s7 + $0x100] sm:$0xff] %vm2197, %v2134
  %2231 = vst.msk [vmem:[%s7 + $0x108] sm:$0xff] %vm2197, %v2136
  %2232 = vst.msk [vmem:[%s7 + $0x110] sm:$0xff] %vm2197, %v2138
  %2233 = vst.msk [vmem:[%s7 + $0x118] sm:$0xff] %vm2197, %v2140
  %2234 = vst.msk [vmem:[%s7 + $0x120] sm:$0xff] %vm2197, %v2142
  %2235 = vst.msk [vmem:[%s7 + $0x128] sm:$0xff] %vm2197, %v2144
  %2236 = vst.msk [vmem:[%s7 + $0x130] sm:$0xff] %vm2197, %v2146
  %2237 = vst.msk [vmem:[%s7 + $0x138] sm:$0xff] %vm2197, %v2148
  %2238 = vst.msk [vmem:[%s7 + $0x140] sm:$0xff] %vm2197, %v2150
  %2239 = vst.msk [vmem:[%s7 + $0x148] sm:$0xff] %vm2197, %v2152
  %2240 = vst.msk [vmem:[%s7 + $0x150] sm:$0xff] %vm2197, %v2154
  %2241 = vst.msk [vmem:[%s7 + $0x158] sm:$0xff] %vm2197, %v2156
  %2242 = vst.msk [vmem:[%s7 + $0x160] sm:$0xff] %vm2197, %v2158
  %2243 = vst.msk [vmem:[%s7 + $0x168] sm:$0xff] %vm2197, %v2160
  %2244 = vst.msk [vmem:[%s7 + $0x170] sm:$0xff] %vm2197, %v2162
  %2245 = vst.msk [vmem:[%s7 + $0x178] sm:$0xff] %vm2197, %v2164
  %2246 = vst.msk [vmem:[%s7 + $0x180] sm:$0xff] %vm2197, %v2166
  %2247 = vst.msk [vmem:[%s7 + $0x188] sm:$0xff] %vm2197, %v2168
  %2248 = vst.msk [vmem:[%s7 + $0x190] sm:$0xff] %vm2197, %v2170
  %2249 = vst.msk [vmem:[%s7 + $0x198] sm:$0xff] %vm2197, %v2172
  %2250 = vst.msk [vmem:[%s7 + $0x1a0] sm:$0xff] %vm2197, %v2174
  %2251 = vst.msk [vmem:[%s7 + $0x1a8] sm:$0xff] %vm2197, %v2176
  %2252 = vst.msk [vmem:[%s7 + $0x1b0] sm:$0xff] %vm2197, %v2178
  %2253 = vst.msk [vmem:[%s7 + $0x1b8] sm:$0xff] %vm2197, %v2180
  %2254 = vst.msk [vmem:[%s7 + $0x1c0] sm:$0xff] %vm2197, %v2182
  %2255 = vst.msk [vmem:[%s7 + $0x1c8] sm:$0xff] %vm2197, %v2184
  %2256 = vst.msk [vmem:[%s7 + $0x1d0] sm:$0xff] %vm2197, %v2186
  %2257 = vst.msk [vmem:[%s7 + $0x1d8] sm:$0xff] %vm2197, %v2188
  %2258 = vst.msk [vmem:[%s7 + $0x1e0] sm:$0xff] %vm2197, %v2190
  %2259 = vst.msk [vmem:[%s7 + $0x1e8] sm:$0xff] %vm2197, %v2192
  %2260 = vst.msk [vmem:[%s7 + $0x1f0] sm:$0xff] %vm2197, %v2194
  %2261 = vst.msk [vmem:[%s7 + $0x1f8] sm:$0xff] %vm2197, %v2196
  // Predicated region
  $region30: #{tpu_custom_call.1} parent=0 // pred_check
    _
  $region31: #{tpu_custom_call.1} parent=0 // pred_check_branch
    %2263 = sbr.rel (0) target = $region33
  $region32: #{tpu_custom_call.1} parent=0 // pred_region
    _
  $region33: #{tpu_custom_call.1} parent=0 // pred_fallthru
    _
  // Predicated region
  $region34: #{tpu_custom_call.1} parent=0 // pred_check
    _
  $region35: #{tpu_custom_call.1} parent=0 // pred_check_branch
    %2265 = sbr.rel (0) target = $region37
  $region36: #{tpu_custom_call.1} parent=0 // pred_region
    _
  $region37: #{tpu_custom_call.1} parent=0 // pred_fallthru
    _

</llo_original>
